<compile_context>
chip_gen: v5e
topology: v5e:2x2
jax: 0.10.0
libtpu: 0.0.40
codegen_flags: <defaults>
</compile_context>

<pallas_src>
import jax
import jax.numpy as jnp
import numpy as np
from jax.experimental import pallas as pl
from jax.experimental.pallas import tpu as pltpu


# ----------------------------------------------------------------------------
# Per-channel folded parameter table (column layout).
# ----------------------------------------------------------------------------
COL_NAMES = [
    "aq", "bq",      # qRGB = aq * x + bq       (folded group_qkv_rgb chain)
    "ak", "bk",      # kRGB
    "av", "bv",      # vRGB
    "akT", "bkT",    # kT   = akT * text + bkT  (folded group_qkv_text chain)
    "avT", "bvT",    # vT
    "wf", "bf",      # group_fus per-channel 1x1 conv
    "t1", "t2",      # temperatures, replicated per channel: t[c // (C//heads)]
]
COL_IDX = {n: i for i, n in enumerate(COL_NAMES)}
N_COLS = len(COL_NAMES)


# ----------------------------------------------------------------------------
# Pallas kernel
# ----------------------------------------------------------------------------
def _build_kernel(C, heads, R, HW, HWp, use_bf16):
    Ch = C // heads
    bt = R // C

    def l2norm_rows(a):
        # F.normalize(..., dim=-1): x / clamp_min(||x||_2, 1e-12)
        ss = jnp.sum(a * a, axis=-1, keepdims=True)
        return a * jax.lax.rsqrt(jnp.maximum(ss, jnp.float32(1e-24)))

    def recip(s):
        # EUP approximate reciprocal (free slot) + one Newton step: error is
        # squared, so the 1e-3/1e-4 final check stays tight.
        r = pl.reciprocal(s, approx=True)
        return r * (jnp.float32(2.0) - s * r)

    def softmax_rows(logits):
        m = jnp.max(logits, axis=-1, keepdims=True)
        e = jnp.exp(logits - m)
        return e * recip(jnp.sum(e, axis=-1, keepdims=True))

    def permute_heads(attn):
        # Fold 'B C X (HW) -> B (X C) H W' (C=heads, X=Ch): within each batch's
        # C rows, output row x*heads+h takes attention row h*Ch+x.  Permute the
        # tiny (R,R) attention matrix instead of the (R,HWp) slab.
        blocks = []
        for b in range(bt):                       # bt is tiny; (C,R) blocks only
            blk = attn[b * C:(b + 1) * C, :]
            blk = blk.reshape(heads, Ch, R).transpose(1, 0, 2).reshape(C, R)
            blocks.append(blk)
        return blocks[0] if bt == 1 else jnp.concatenate(blocks, axis=0)

    def attention(q, k, v, t_col, mask, permute):
        # Scaling q rows by the per-(batch,head) temperature == scaling logits.
        qn = l2norm_rows(q) * t_col
        kn = l2norm_rows(k)
        if use_bf16:
            qn = qn.astype(jnp.bfloat16)
            kn = kn.astype(jnp.bfloat16)
        # One (R,HWp)@(HWp,R) matmul; contract last dims (no materialized
        # transpose).  Logits / mask / softmax stay in f32.
        logits = jax.lax.dot_general(
            qn, kn, (((1,), (1,)), ((), ())),
            preferred_element_type=jnp.float32) + mask
        attn = softmax_rows(logits)               # (R,R), zero off-block
        if permute:
            attn = permute_heads(attn)
        if use_bf16:
            attn = attn.astype(jnp.bfloat16)
            v = v.astype(jnp.bfloat16)
        return jnp.dot(attn, v, preferred_element_type=jnp.float32)

    def kernel(x_ref, txt_ref, p_ref, m_ref, o_ref):
        P = p_ref[...].astype(jnp.float32)        # (R, N_COLS), resident block
        mask = m_ref[...]                         # (R, R) additive mask, resident

        def col(name):
            i = COL_IDX[name]
            return P[:, i:i + 1]                  # (R,1), broadcasts over HWp

        aq, bq = col("aq"), col("bq")
        ak, bk = col("ak"), col("bk")
        av, bv = col("av"), col("bv")
        akT, bkT = col("akT"), col("bkT")
        avT, bvT = col("avT"), col("bvT")
        wf, bf = col("wf"), col("bf")
        t1c, t2c = col("t1"), col("t2")

        x = x_ref[...].astype(jnp.float32)        # (R, HWp): bt fused batches
        txt = txt_ref[...].astype(jnp.float32)

        # Folded group_qkv_rgb / group_qkv_text chains (per-channel affine),
        # applied to the whole fused slab at once.
        qR = aq * x + bq
        kR = ak * x + bk
        vR = av * x + bv
        kT = akT * txt + bkT
        vT = avT * txt + bvT

        if HWp != HW:
            # Inputs are zero-padded, so only the bias leaks into padded pixel
            # columns.  Masking vR keeps x1's padded columns exactly zero (x1
            # is q of the second attention); vT padding only reaches output
            # columns the wrapper slices off.
            valid = (jax.lax.broadcasted_iota(jnp.int32, (1, HWp), 1)
                     < HW).astype(jnp.float32)
            qR, kR, vR, kT = qR * valid, kR * valid, vR * valid, kT * valid

        x1 = attention(qR, kR, vR, t1c, mask, permute=False)
        x2 = attention(x1, kT, vT, t2c, mask, permute=True)

        # group_fus: per-channel 1x1 conv on the already-rearranged rows.
        o_ref[...] = (wf * x2 + bf).astype(o_ref.dtype)

    return kernel


# ----------------------------------------------------------------------------
# Generation-aware block-batch / VMEM heuristics.
# ----------------------------------------------------------------------------
def _chip_info():
    """(conservative scoped-VMEM bytes, #TensorCores per device)."""
    scoped, n_tc = 16 << 20, 1            # v5e defaults (most conservative)
    try:
        kind = jax.devices()[0].device_kind.lower()
    except Exception:
        kind = ""
    if ("v6" in kind) or ("trillium" in kind):
        scoped, n_tc = 32 << 20, 1        # v6e: 32 MiB scoped, 1 TC
    if "7" in kind:
        scoped, n_tc = 32 << 20, 2        # v7x: 64 MiB phys / 32 MiB scoped, 2 TC
    return scoped, n_tc


def _estimate_vmem_bytes(R, HWp, in_itemsize):
    blocks = 3 * 2 * R * HWp * in_itemsize        # x/text/out, double-buffered
    temps = 8 * R * HWp * 4                       # qR,kR,vR,kT,vT,x1,x2 + slack
    small = (N_COLS + 2 * R) * R * 4              # params + mask + logits
    return blocks + temps + small


def _pick_block_batch(B, C, HWp, in_itemsize, scoped_vmem, n_tc):
    if C % 8 != 0:
        return B                                  # full-array block is always legal
    # Per-step working set: double-buffered blocks + in-kernel f32 temporaries.
    per_batch = C * HWp * (3 * 2 * in_itemsize + 8 * 4)
    budget = int(scoped_vmem * 0.6)               # headroom for compiler scratch
    bt = max(1, min(B, budget // max(per_batch, 1)))
    bt = min(bt, max(1, 256 // C))                # keep the fused gram ~<= 1 MXU tile
    if n_tc >= 2 and B >= 2:
        bt = min(bt, B // 2)                      # >=2 grid steps only on v7x
    bt = max(bt, 1)
    while B % bt:
        bt -= 1
    return bt


def _make_block_mask(bt, C, heads):
    """Additive (bt*C, bt*C) batch+head block-diagonal mask, built host-side."""
    R = bt * C
    Ch = C // heads
    grp = np.arange(R) // Ch                      # == batch*heads + head (Ch | C)
    m = np.where(grp[:, None] == grp[None, :], 0.0, -1e30).astype(np.float32)
    return jnp.asarray(m)


# ----------------------------------------------------------------------------
# Wrapper
# ----------------------------------------------------------------------------
def channel_attention_rs(x, text, packed_params, *, num_heads,
                         block_batch=None, use_bf16_matmul=False):
    B, C, H, W = x.shape
    assert C % num_heads == 0
    HW = H * W
    HWp = ((HW + 127) // 128) * 128               # lane-dense loads/stores
    xr = x.reshape(B, C, HW)
    tr = text.reshape(B, C, HW)
    if HWp != HW:
        pad = ((0, 0), (0, 0), (0, HWp - HW))
        xr = jnp.pad(xr, pad)
        tr = jnp.pad(tr, pad)
    xf = xr.reshape(B * C, HWp)                   # fused (batch*channel, pixel) slab
    tf = tr.reshape(B * C, HWp)

    scoped_vmem, n_tc = _chip_info()
    if block_batch is None:
        bt = _pick_block_batch(B, C, HWp, xf.dtype.itemsize, scoped_vmem, n_tc)
    else:
        bt = block_batch
    assert B % bt == 0
    assert (bt * C) % 8 == 0 or bt == B
    R = bt * C

    params_t = jnp.tile(packed_params.astype(jnp.float32), (bt, 1))   # (R, N_COLS)
    mask = _make_block_mask(bt, C, num_heads)                         # (R, R)

    kernel = _build_kernel(C, num_heads, R, HW, HWp, use_bf16_matmul)

    # Only raise the scoped-VMEM ceiling when a user-forced block actually
    # needs it (the auto heuristic keeps the estimate well under the default).
    est = _estimate_vmem_bytes(R, HWp, xf.dtype.itemsize)
    vmem_limit = None
    if est > int(0.8 * scoped_vmem):
        vmem_limit = int(min(max(2 * est, 32 << 20), 96 << 20))

    out = pl.pallas_call(
        kernel,
        out_shape=jax.ShapeDtypeStruct((B * C, HWp), x.dtype),
        grid=(B // bt,),
        in_specs=[
            pl.BlockSpec((R, HWp), lambda b: (b, 0)),
            pl.BlockSpec((R, HWp), lambda b: (b, 0)),
            pl.BlockSpec((R, N_COLS), lambda b: (0, 0)),   # resident across steps
            pl.BlockSpec((R, R), lambda b: (0, 0)),        # resident across steps
        ],
        out_specs=pl.BlockSpec((R, HWp), lambda b: (b, 0)),
        compiler_params=pltpu.CompilerParams(
            dimension_semantics=("parallel",),
            vmem_limit_bytes=vmem_limit),
    )(xf, tf, params_t, mask)

    out = out.reshape(B, C, HWp)
    if HWp != HW:
        out = out[..., :HW]
    return out.reshape(B, C, H, W)


# ----------------------------------------------------------------------------
# Parameter construction (PyTorch conv-weight layout) and host-side folding of
# the grouped 1x1 conv chains into per-channel affine coefficients.
# ----------------------------------------------------------------------------
def make_params(key, C, heads):
    ks = jax.random.split(key, 18)

    def rn(k, shape, scale):
        return jax.random.normal(k, shape, jnp.float32) * scale

    return dict(
        # group_qkv_rgb (weight shape = (Cout, Cin/groups))
        wr1=rn(ks[0], (2 * C, 1), 0.5), br1=rn(ks[1], (2 * C,), 0.1),
        wr2=rn(ks[2], (C, 2), 0.5),     br2=rn(ks[3], (C,), 0.1),
        wr3=rn(ks[4], (C, 1), 0.5),     br3=rn(ks[5], (C,), 0.1),
        wr4=rn(ks[6], (3 * C, 1), 0.5), br4=rn(ks[7], (3 * C,), 0.1),
        # group_qkv_text
        wt1=rn(ks[8], (2 * C, 1), 0.5),  bt1=rn(ks[9], (2 * C,), 0.1),
        wt2=rn(ks[10], (C, 2), 0.5),     bt2=rn(ks[11], (C,), 0.1),
        wt3=rn(ks[12], (2 * C, 1), 0.5), bt3=rn(ks[13], (2 * C,), 0.1),
        wt4=rn(ks[14], (2 * C, 2), 0.5), bt4=rn(ks[15], (2 * C,), 0.1),
        # group_fus
        wf=rn(ks[16], (C, 1), 0.5), bf=rn(ks[17], (C,), 0.1),
        # nn.Parameter(torch.ones(1, heads, 1, 1))
        t1=jnp.ones((heads,), jnp.float32),
        t2=jnp.ones((heads,), jnp.float32),
    )


def fold_params(raw, C, heads):
    """Fold the grouped-conv chains into per-channel affines; pack (C, N_COLS)."""
    Ch = C // heads
    # ---- group_qkv_rgb chain ----
    w10, w11 = raw["wr1"][0::2, 0], raw["wr1"][1::2, 0]
    b10, b11 = raw["br1"][0::2], raw["br1"][1::2]
    w20, w21, bb2 = raw["wr2"][:, 0], raw["wr2"][:, 1], raw["br2"]
    a2 = w20 * w10 + w21 * w11
    c2 = w20 * b10 + w21 * b11 + bb2
    w3, b3 = raw["wr3"][:, 0], raw["br3"]
    a3 = w3 * a2
    c3 = w3 * c2 + b3
    w4q, w4k, w4v = raw["wr4"][0::3, 0], raw["wr4"][1::3, 0], raw["wr4"][2::3, 0]
    b4q, b4k, b4v = raw["br4"][0::3], raw["br4"][1::3], raw["br4"][2::3]
    aq, bq = w4q * a3, w4q * c3 + b4q
    ak, bk = w4k * a3, w4k * c3 + b4k
    av, bv = w4v * a3, w4v * c3 + b4v
    # ---- group_qkv_text chain ----
    u10, u11 = raw["wt1"][0::2, 0], raw["wt1"][1::2, 0]
    d10, d11 = raw["bt1"][0::2], raw["bt1"][1::2]
    u20, u21, dd2 = raw["wt2"][:, 0], raw["wt2"][:, 1], raw["bt2"]
    ag2 = u20 * u10 + u21 * u11
    cg2 = u20 * d10 + u21 * d11 + dd2
    u30, u31 = raw["wt3"][0::2, 0], raw["wt3"][1::2, 0]
    d30, d31 = raw["bt3"][0::2], raw["bt3"][1::2]
    a30, c30 = u30 * ag2, u30 * cg2 + d30
    a31, c31 = u31 * ag2, u31 * cg2 + d31
    u4k0, u4k1 = raw["wt4"][0::2, 0], raw["wt4"][0::2, 1]
    u4v0, u4v1 = raw["wt4"][1::2, 0], raw["wt4"][1::2, 1]
    d4k, d4v = raw["bt4"][0::2], raw["bt4"][1::2]
    akT = u4k0 * a30 + u4k1 * a31
    bkT = u4k0 * c30 + u4k1 * c31 + d4k
    avT = u4v0 * a30 + u4v1 * a31
    bvT = u4v0 * c30 + u4v1 * c31 + d4v

    cols = {
        "aq": aq, "bq": bq, "ak": ak, "bk": bk, "av": av, "bv": bv,
        "akT": akT, "bkT": bkT, "avT": avT, "bvT": bvT,
        "wf": raw["wf"][:, 0], "bf": raw["bf"],
        "t1": jnp.repeat(raw["t1"], Ch),
        "t2": jnp.repeat(raw["t2"], Ch),
    }
    return jnp.stack([cols[n] for n in COL_NAMES], axis=1).astype(jnp.float32)


# ----------------------------------------------------------------------------
# Pure-JAX reference (mirrors the PyTorch module op-by-op) for verification.
# ----------------------------------------------------------------------------
def _gconv1x1(x, w, b, groups):
    # x: (B, Cin, HW); w: (Cout, Cin/groups); b: (Cout,)
    B, Cin, HW = x.shape
    Cout = w.shape[0]
    cin_g, cout_g = Cin // groups, Cout // groups
    xg = x.reshape(B, groups, cin_g, HW)
    wg = w.reshape(groups, cout_g, cin_g)
    out = jnp.einsum("bgip,goi->bgop", xg, wg,
                     precision=jax.lax.Precision.HIGHEST)
    return out.reshape(B, Cout, HW) + b[None, :, None]


def ref_forward(x, text, raw, heads):
    B, C, H, W = x.shape
    HW = H * W
    Ch = C // heads
    xr, tr = x.reshape(B, C, HW), text.reshape(B, C, HW)

    h = _gconv1x1(xr, raw["wr1"], raw["br1"], C)
    h = _gconv1x1(h, raw["wr2"], raw["br2"], C)
    h = _gconv1x1(h, raw["wr3"], raw["br3"], C)
    h = _gconv1x1(h, raw["wr4"], raw["br4"], C).reshape(B, C, 3, HW)
    qR, kR, vR = h[:, :, 0, :], h[:, :, 1, :], h[:, :, 2, :]

    g = _gconv1x1(tr, raw["wt1"], raw["bt1"], C)
    g = _gconv1x1(g, raw["wt2"], raw["bt2"], C)
    g = _gconv1x1(g, raw["wt3"], raw["bt3"], C)
    g = _gconv1x1(g, raw["wt4"], raw["bt4"], C).reshape(B, C, 2, HW)
    kT, vT = g[:, :, 0, :], g[:, :, 1, :]

    def to_heads(a):
        return a.reshape(B, heads, Ch, HW)

    def attnfun(q, k, v, t):
        qn = q / jnp.maximum(jnp.sqrt(jnp.sum(q * q, -1, keepdims=True)), 1e-12)
        kn = k / jnp.maximum(jnp.sqrt(jnp.sum(k * k, -1, keepdims=True)), 1e-12)
        attn = jnp.einsum("bhcx,bhdx->bhcd", qn, kn,
                          precision=jax.lax.Precision.HIGHEST)
        attn = attn * t[None, :, None, None]
        attn = jax.nn.softmax(attn, axis=-1)
        return jnp.einsum("bhcd,bhdx->bhcx", attn, v,
                          precision=jax.lax.Precision.HIGHEST)

    x1 = attnfun(to_heads(qR), to_heads(kR), to_heads(vR), raw["t1"])
    x2 = attnfun(x1, to_heads(kT), to_heads(vT), raw["t2"])
    # rearrange 'B C X (H W) -> B (X C) H W' with C=heads, X=Ch
    x2 = x2.transpose(0, 2, 1, 3).reshape(B, C, HW)
    out = _gconv1x1(x2, raw["wf"], raw["bf"], C)
    return out.reshape(B, C, H, W)


# ----------------------------------------------------------------------------
if __name__ == "__main__":
    C, heads = 32, 8                     # embed_dim=32, num_chans (heads)=8
    key = jax.random.PRNGKey(0)
    kx, kt, kp, kx2, kt2 = jax.random.split(key, 5)
    raw_params = make_params(kp, C, heads)
    packed_params = fold_params(raw_params, C, heads)

    # Case 1: aligned HW (16x16), auto block_batch, f32 MXU path (tight check).
    B1, H1, W1 = 2, 16, 16
    x1 = jax.random.normal(kx, (B1, C, H1, W1), jnp.float32)
    t1 = jax.random.normal(kt, (B1, C, H1, W1), jnp.float32)
    out1 = jax.block_until_ready(
        channel_attention_rs(x1, t1, packed_params, num_heads=heads))
    ref1 = jax.block_until_ready(ref_forward(x1, t1, raw_params, heads))
    np.testing.assert_allclose(np.asarray(out1), np.asarray(ref1),
                               rtol=1e-3, atol=1e-4)

    # Case 2: non-128-multiple HW (13x13) + multi-step grid (exercises the
    # padded-lane path and the b>0 index_map path).
    B2, H2, W2 = 4, 13, 13
    x2 = jax.random.normal(kx2, (B2, C, H2, W2), jnp.float32)
    t2 = jax.random.normal(kt2, (B2, C, H2, W2), jnp.float32)
    out2 = jax.block_until_ready(
        channel_attention_rs(x2, t2, packed_params, num_heads=heads,
                             block_batch=2))
    ref2 = jax.block_until_ready(ref_forward(x2, t2, raw_params, heads))
    np.testing.assert_allclose(np.asarray(out2), np.asarray(ref2),
                               rtol=1e-3, atol=1e-4)

    # Case 3: bf16 MXU operands (f32 accumulation / logits / softmax).  Looser
    # tolerance: this path is the lever for large, HBM-bound shapes.
    out3 = jax.block_until_ready(
        channel_attention_rs(x1, t1, packed_params, num_heads=heads,
                             use_bf16_matmul=True))
    np.testing.assert_allclose(np.asarray(out3), np.asarray(ref1),
                               rtol=5e-2, atol=1e-2)

    print("KERNEL_OK")
</pallas_src>

<mosaic_0001>
module attributes {stable_mosaic.version = 11 : i64} {
  func.func @kernel(%arg0: i32, %arg1: memref<64x256xf32, #tpu.memory_space<vmem>>, %arg2: memref<64x256xf32, #tpu.memory_space<vmem>>, %arg3: memref<64x14xf32, #tpu.memory_space<vmem>>, %arg4: memref<64x64xf32, #tpu.memory_space<vmem>>, %arg5: memref<64x256xf32, #tpu.memory_space<vmem>>) attributes {dimension_semantics = [#tpu.dimension_semantics<parallel>], iteration_bounds = array<i64: 1>, scalar_prefetch = 0 : i64, scratch_operands = 0 : i64, tpu.core_type = #tpu.core_type<tc>, window_params = [{transform_indices = @transform_0, window_bounds = array<i64: 64, 256>}, {transform_indices = @transform_1, window_bounds = array<i64: 64, 256>}, {pipeline_mode = #tpu.pipeline_mode<synchronous>, transform_indices = @transform_2, window_bounds = array<i64: 64, 14>}, {pipeline_mode = #tpu.pipeline_mode<synchronous>, transform_indices = @transform_3, window_bounds = array<i64: 64, 64>}, {transform_indices = @transform_4, window_bounds = array<i64: 64, 256>}]} {
    %c0 = arith.constant 0 : index
    %c0_0 = arith.constant 0 : index
    %0 = vector.load %arg3[%c0, %c0_0] : memref<64x14xf32, #tpu.memory_space<vmem>>, vector<64x14xf32>
    %c0_1 = arith.constant 0 : index
    %c0_2 = arith.constant 0 : index
    %1 = vector.load %arg4[%c0_1, %c0_2] : memref<64x64xf32, #tpu.memory_space<vmem>>, vector<64x64xf32>
    %2 = vector.extract_strided_slice %0 {offsets = [0, 0], sizes = [64, 1], strides = [1, 1]} : vector<64x14xf32> to vector<64x1xf32>
    %3 = vector.extract_strided_slice %0 {offsets = [0, 1], sizes = [64, 1], strides = [1, 1]} : vector<64x14xf32> to vector<64x1xf32>
    %4 = vector.extract_strided_slice %0 {offsets = [0, 2], sizes = [64, 1], strides = [1, 1]} : vector<64x14xf32> to vector<64x1xf32>
    %5 = vector.extract_strided_slice %0 {offsets = [0, 3], sizes = [64, 1], strides = [1, 1]} : vector<64x14xf32> to vector<64x1xf32>
    %6 = vector.extract_strided_slice %0 {offsets = [0, 4], sizes = [64, 1], strides = [1, 1]} : vector<64x14xf32> to vector<64x1xf32>
    %7 = vector.extract_strided_slice %0 {offsets = [0, 5], sizes = [64, 1], strides = [1, 1]} : vector<64x14xf32> to vector<64x1xf32>
    %8 = vector.extract_strided_slice %0 {offsets = [0, 6], sizes = [64, 1], strides = [1, 1]} : vector<64x14xf32> to vector<64x1xf32>
    %9 = vector.extract_strided_slice %0 {offsets = [0, 7], sizes = [64, 1], strides = [1, 1]} : vector<64x14xf32> to vector<64x1xf32>
    %10 = vector.extract_strided_slice %0 {offsets = [0, 8], sizes = [64, 1], strides = [1, 1]} : vector<64x14xf32> to vector<64x1xf32>
    %11 = vector.extract_strided_slice %0 {offsets = [0, 9], sizes = [64, 1], strides = [1, 1]} : vector<64x14xf32> to vector<64x1xf32>
    %12 = vector.extract_strided_slice %0 {offsets = [0, 10], sizes = [64, 1], strides = [1, 1]} : vector<64x14xf32> to vector<64x1xf32>
    %13 = vector.extract_strided_slice %0 {offsets = [0, 11], sizes = [64, 1], strides = [1, 1]} : vector<64x14xf32> to vector<64x1xf32>
    %14 = vector.extract_strided_slice %0 {offsets = [0, 12], sizes = [64, 1], strides = [1, 1]} : vector<64x14xf32> to vector<64x1xf32>
    %15 = vector.extract_strided_slice %0 {offsets = [0, 13], sizes = [64, 1], strides = [1, 1]} : vector<64x14xf32> to vector<64x1xf32>
    %c0_3 = arith.constant 0 : index
    %c0_4 = arith.constant 0 : index
    %16 = vector.load %arg1[%c0_3, %c0_4] : memref<64x256xf32, #tpu.memory_space<vmem>>, vector<64x256xf32>
    %c0_5 = arith.constant 0 : index
    %c0_6 = arith.constant 0 : index
    %17 = vector.load %arg2[%c0_5, %c0_6] : memref<64x256xf32, #tpu.memory_space<vmem>>, vector<64x256xf32>
    %18 = vector.broadcast %2 : vector<64x1xf32> to vector<64x256xf32>
    %19 = arith.mulf %18, %16 : vector<64x256xf32>
    %20 = vector.broadcast %3 : vector<64x1xf32> to vector<64x256xf32>
    %21 = arith.addf %19, %20 : vector<64x256xf32>
    %22 = vector.broadcast %4 : vector<64x1xf32> to vector<64x256xf32>
    %23 = arith.mulf %22, %16 : vector<64x256xf32>
    %24 = vector.broadcast %5 : vector<64x1xf32> to vector<64x256xf32>
    %25 = arith.addf %23, %24 : vector<64x256xf32>
    %26 = vector.broadcast %6 : vector<64x1xf32> to vector<64x256xf32>
    %27 = arith.mulf %26, %16 : vector<64x256xf32>
    %28 = vector.broadcast %7 : vector<64x1xf32> to vector<64x256xf32>
    %29 = arith.addf %27, %28 : vector<64x256xf32>
    %30 = vector.broadcast %8 : vector<64x1xf32> to vector<64x256xf32>
    %31 = arith.mulf %30, %17 : vector<64x256xf32>
    %32 = vector.broadcast %9 : vector<64x1xf32> to vector<64x256xf32>
    %33 = arith.addf %31, %32 : vector<64x256xf32>
    %34 = vector.broadcast %10 : vector<64x1xf32> to vector<64x256xf32>
    %35 = arith.mulf %34, %17 : vector<64x256xf32>
    %36 = vector.broadcast %11 : vector<64x1xf32> to vector<64x256xf32>
    %37 = arith.addf %35, %36 : vector<64x256xf32>
    %38 = arith.mulf %21, %21 : vector<64x256xf32>
    %cst = arith.constant dense<0.000000e+00> : vector<64xf32>
    %39 = vector.multi_reduction <add>, %38, %cst [1] : vector<64x256xf32> to vector<64xf32>
    %40 = vector.shape_cast %39 : vector<64xf32> to vector<64x1xf32>
    %cst_7 = arith.constant 1.000000e-24 : f32
    %41 = vector.broadcast %cst_7 : f32 to vector<64x1xf32>
    %42 = arith.maximumf %40, %41 : vector<64x1xf32>
    %43 = math.rsqrt %42 : vector<64x1xf32>
    %44 = vector.broadcast %43 : vector<64x1xf32> to vector<64x256xf32>
    %45 = arith.mulf %21, %44 : vector<64x256xf32>
    %46 = vector.broadcast %14 : vector<64x1xf32> to vector<64x256xf32>
    %47 = arith.mulf %45, %46 : vector<64x256xf32>
    %48 = arith.mulf %25, %25 : vector<64x256xf32>
    %cst_8 = arith.constant dense<0.000000e+00> : vector<64xf32>
    %49 = vector.multi_reduction <add>, %48, %cst_8 [1] : vector<64x256xf32> to vector<64xf32>
    %50 = vector.shape_cast %49 : vector<64xf32> to vector<64x1xf32>
    %cst_9 = arith.constant 1.000000e-24 : f32
    %51 = vector.broadcast %cst_9 : f32 to vector<64x1xf32>
    %52 = arith.maximumf %50, %51 : vector<64x1xf32>
    %53 = math.rsqrt %52 : vector<64x1xf32>
    %54 = vector.broadcast %53 : vector<64x1xf32> to vector<64x256xf32>
    %55 = arith.mulf %25, %54 : vector<64x256xf32>
    %cst_10 = arith.constant dense<0.000000e+00> : vector<64x64xf32>
    %56 = tpu.matmul %47, %55, %cst_10 {dimension_numbers = #tpu.dot_dimension_numbers<[1], [1], [0], [0], [0, 0, 1, 0], [], []>} : vector<64x256xf32>, vector<64x256xf32>, vector<64x64xf32> -> vector<64x64xf32>
    %57 = arith.addf %56, %1 : vector<64x64xf32>
    %cst_11 = arith.constant dense<0xFF800000> : vector<64xf32>
    %58 = vector.multi_reduction <maximumf>, %57, %cst_11 [1] : vector<64x64xf32> to vector<64xf32>
    %59 = vector.shape_cast %58 : vector<64xf32> to vector<64x1xf32>
    %60 = vector.broadcast %59 : vector<64x1xf32> to vector<64x64xf32>
    %61 = arith.subf %57, %60 : vector<64x64xf32>
    %62 = math.exp %61 : vector<64x64xf32>
    %cst_12 = arith.constant dense<0.000000e+00> : vector<64xf32>
    %63 = vector.multi_reduction <add>, %62, %cst_12 [1] : vector<64x64xf32> to vector<64xf32>
    %64 = vector.shape_cast %63 : vector<64xf32> to vector<64x1xf32>
    %65 = tpu.reciprocal %64 {approx = true} : vector<64x1xf32> -> vector<64x1xf32>
    %66 = arith.mulf %64, %65 : vector<64x1xf32>
    %cst_13 = arith.constant 2.000000e+00 : f32
    %67 = vector.broadcast %cst_13 : f32 to vector<64x1xf32>
    %68 = arith.subf %67, %66 : vector<64x1xf32>
    %69 = arith.mulf %65, %68 : vector<64x1xf32>
    %70 = vector.broadcast %69 : vector<64x1xf32> to vector<64x64xf32>
    %71 = arith.mulf %62, %70 : vector<64x64xf32>
    %cst_14 = arith.constant dense<0.000000e+00> : vector<64x256xf32>
    %72 = tpu.matmul %71, %29, %cst_14 {dimension_numbers = #tpu.dot_dimension_numbers<[1], [0], [0], [1], [0, 0, 1, 1], [], []>} : vector<64x64xf32>, vector<64x256xf32>, vector<64x256xf32> -> vector<64x256xf32>
    %73 = arith.mulf %72, %72 : vector<64x256xf32>
    %cst_15 = arith.constant dense<0.000000e+00> : vector<64xf32>
    %74 = vector.multi_reduction <add>, %73, %cst_15 [1] : vector<64x256xf32> to vector<64xf32>
    %75 = vector.shape_cast %74 : vector<64xf32> to vector<64x1xf32>
    %cst_16 = arith.constant 1.000000e-24 : f32
    %76 = vector.broadcast %cst_16 : f32 to vector<64x1xf32>
    %77 = arith.maximumf %75, %76 : vector<64x1xf32>
    %78 = math.rsqrt %77 : vector<64x1xf32>
    %79 = vector.broadcast %78 : vector<64x1xf32> to vector<64x256xf32>
    %80 = arith.mulf %72, %79 : vector<64x256xf32>
    %81 = vector.broadcast %15 : vector<64x1xf32> to vector<64x256xf32>
    %82 = arith.mulf %80, %81 : vector<64x256xf32>
    %83 = arith.mulf %33, %33 : vector<64x256xf32>
    %cst_17 = arith.constant dense<0.000000e+00> : vector<64xf32>
    %84 = vector.multi_reduction <add>, %83, %cst_17 [1] : vector<64x256xf32> to vector<64xf32>
    %85 = vector.shape_cast %84 : vector<64xf32> to vector<64x1xf32>
    %cst_18 = arith.constant 1.000000e-24 : f32
    %86 = vector.broadcast %cst_18 : f32 to vector<64x1xf32>
    %87 = arith.maximumf %85, %86 : vector<64x1xf32>
    %88 = math.rsqrt %87 : vector<64x1xf32>
    %89 = vector.broadcast %88 : vector<64x1xf32> to vector<64x256xf32>
    %90 = arith.mulf %33, %89 : vector<64x256xf32>
    %cst_19 = arith.constant dense<0.000000e+00> : vector<64x64xf32>
    %91 = tpu.matmul %82, %90, %cst_19 {dimension_numbers = #tpu.dot_dimension_numbers<[1], [1], [0], [0], [0, 0, 1, 0], [], []>} : vector<64x256xf32>, vector<64x256xf32>, vector<64x64xf32> -> vector<64x64xf32>
    %92 = arith.addf %91, %1 : vector<64x64xf32>
    %cst_20 = arith.constant dense<0xFF800000> : vector<64xf32>
    %93 = vector.multi_reduction <maximumf>, %92, %cst_20 [1] : vector<64x64xf32> to vector<64xf32>
    %94 = vector.shape_cast %93 : vector<64xf32> to vector<64x1xf32>
    %95 = vector.broadcast %94 : vector<64x1xf32> to vector<64x64xf32>
    %96 = arith.subf %92, %95 : vector<64x64xf32>
    %97 = math.exp %96 : vector<64x64xf32>
    %cst_21 = arith.constant dense<0.000000e+00> : vector<64xf32>
    %98 = vector.multi_reduction <add>, %97, %cst_21 [1] : vector<64x64xf32> to vector<64xf32>
    %99 = vector.shape_cast %98 : vector<64xf32> to vector<64x1xf32>
    %100 = tpu.reciprocal %99 {approx = true} : vector<64x1xf32> -> vector<64x1xf32>
    %101 = arith.mulf %99, %100 : vector<64x1xf32>
    %cst_22 = arith.constant 2.000000e+00 : f32
    %102 = vector.broadcast %cst_22 : f32 to vector<64x1xf32>
    %103 = arith.subf %102, %101 : vector<64x1xf32>
    %104 = arith.mulf %100, %103 : vector<64x1xf32>
    %105 = vector.broadcast %104 : vector<64x1xf32> to vector<64x64xf32>
    %106 = arith.mulf %97, %105 : vector<64x64xf32>
    %107 = vector.extract_strided_slice %106 {offsets = [0, 0], sizes = [32, 64], strides = [1, 1]} : vector<64x64xf32> to vector<32x64xf32>
    %108 = vector.shape_cast %107 : vector<32x64xf32> to vector<8x4x64xf32>
    %109 = tpu.transpose %108, [1, 0, 2] : vector<8x4x64xf32> -> vector<4x8x64xf32>
    %110 = vector.shape_cast %109 : vector<4x8x64xf32> to vector<32x64xf32>
    %111 = vector.extract_strided_slice %106 {offsets = [32, 0], sizes = [32, 64], strides = [1, 1]} : vector<64x64xf32> to vector<32x64xf32>
    %112 = vector.shape_cast %111 : vector<32x64xf32> to vector<8x4x64xf32>
    %113 = tpu.transpose %112, [1, 0, 2] : vector<8x4x64xf32> -> vector<4x8x64xf32>
    %114 = vector.shape_cast %113 : vector<4x8x64xf32> to vector<32x64xf32>
    %115 = tpu.concatenate %110, %114 in 0 : vector<32x64xf32>, vector<32x64xf32> -> vector<64x64xf32>
    %cst_23 = arith.constant dense<0.000000e+00> : vector<64x256xf32>
    %116 = tpu.matmul %115, %37, %cst_23 {dimension_numbers = #tpu.dot_dimension_numbers<[1], [0], [0], [1], [0, 0, 1, 1], [], []>} : vector<64x64xf32>, vector<64x256xf32>, vector<64x256xf32> -> vector<64x256xf32>
    %117 = vector.broadcast %12 : vector<64x1xf32> to vector<64x256xf32>
    %118 = arith.mulf %117, %116 : vector<64x256xf32>
    %119 = vector.broadcast %13 : vector<64x1xf32> to vector<64x256xf32>
    %120 = arith.addf %118, %119 : vector<64x256xf32>
    %c0_24 = arith.constant 0 : index
    %c0_25 = arith.constant 0 : index
    %121 = vector.load %arg5[%c0_24, %c0_25] : memref<64x256xf32, #tpu.memory_space<vmem>>, vector<64x256xf32>
    tpu.vector_store %arg5[%c0_24, %c0_25], %120 {strides = array<i32>} : memref<64x256xf32, #tpu.memory_space<vmem>>, vector<64x256xf32>,
    return
  }
  func.func @transform_0(%arg0: i32) -> (i32, i32) {
    %c0_i32 = arith.constant 0 : i32
    %c0_i32_0 = arith.constant 0 : i32
    return %arg0, %c0_i32 : i32, i32
  }
  func.func @transform_1(%arg0: i32) -> (i32, i32) {
    %c0_i32 = arith.constant 0 : i32
    %c0_i32_0 = arith.constant 0 : i32
    return %arg0, %c0_i32 : i32, i32
  }
  func.func @transform_2(%arg0: i32) -> (i32, i32) {
    %c0_i32 = arith.constant 0 : i32
    %c0_i32_0 = arith.constant 0 : i32
    %c0_i32_1 = arith.constant 0 : i32
    return %c0_i32, %c0_i32_0 : i32, i32
  }
  func.func @transform_3(%arg0: i32) -> (i32, i32) {
    %c0_i32 = arith.constant 0 : i32
    %c0_i32_0 = arith.constant 0 : i32
    %c0_i32_1 = arith.constant 0 : i32
    return %c0_i32, %c0_i32_0 : i32, i32
  }
  func.func @transform_4(%arg0: i32) -> (i32, i32) {
    %c0_i32 = arith.constant 0 : i32
    %c0_i32_0 = arith.constant 0 : i32
    return %arg0, %c0_i32 : i32, i32
  }
}

</mosaic_0001>

<llo_original>
// kernel: tpu_custom_call.1
$region0: #{tpu_custom_call.1}
  #allocation0 [shape = 'u32[]', space=smem, size = 0x4, offset = 0x4, fixed_abs, tag = 'smem constant byte address 0x4 - core index']
  #allocation1 [shape = 'u32[72,128]{1,0:T(1,128)}', space=vmem, size = 0x9000, scoped, tag = 'internal scratch']
  %s0 = inlined_call_operand.hbm [shape: f32[64,256], index: 0, kind: input, shape index: {}]
  %s1 = inlined_call_operand.hbm [shape: f32[64,256], index: 1, kind: input, shape index: {}]
  %s2 = inlined_call_operand.vmem [shape: f32[64,14], index: 2, kind: input, shape index: {}]
  %s3 = inlined_call_operand.vmem [shape: f32[64,64], index: 3, kind: input, shape index: {}]
  %s4 = inlined_call_operand.hbm [shape: f32[64,256], index: 4, kind: output, shape index: {}]
  %s5 = sld [smem:[#allocation0]]
  $region34: #{tpu_custom_call.1} parent=0
    _
  %s7 = ssub.s32 1, %s5
  %s8 = scalar_select 0, %s7, %s5
  $region1: #{tpu_custom_call.1} parent=0
    #allocation2 [shape = 'u8[65536]{0}', space=vmem, size = 0x10000, scoped, tag = 'input window, operand 0, single buffered']
    #allocation3 [shape = 's32[1]{0}', space=sflag, size = 0x4, scoped, tag = 'scoped memory for tpu_custom_call.1']
    #allocation4 [shape = 's32[1]{0}', space=sflag, size = 0x4, scoped, tag = 'scoped memory for tpu_custom_call.1']
    #allocation5 [shape = 'u8[65536]{0}', space=vmem, size = 0x10000, scoped, tag = 'input window, operand 1, single buffered']
    #allocation6 [shape = 's32[1]{0}', space=sflag, size = 0x4, scoped, tag = 'scoped memory for tpu_custom_call.1']
    #allocation7 [shape = 'u8[65536]{0}', space=vmem, size = 0x10000, scoped, tag = 'output window, operand 0, single buffered']
    %9 = vsyncpa [#allocation3], 0
    %10 = vsyncpa [#allocation6], 0
    %11 = vsyncpa [#allocation4], 0
    // Predicated region
    $region2: #{tpu_custom_call.1} parent=1 // pred_check
      _
    $region3: #{tpu_custom_call.1} parent=1 // pred_check_branch
      %13 = sbr.rel (0) target = $region5
    $region4: #{tpu_custom_call.1} parent=1 // pred_region
      %15 = vsyncadd [#allocation3], 0
      %s16 = sshll.u32 %s0, 4
      %s17 = int_to_ptr.hbm [resolvable:$true] %s16
      %s18 = sshll.u32 [#allocation2], 4
      %s19 = int_to_ptr.vmem [resolvable:$true] %s18
      %24 = dma.hbm_to_vmem [thread:$0]  %s17, 2048, %s19, [#allocation3], 256, 256, 16
    $region5: #{tpu_custom_call.1} parent=1 // pred_fallthru
      _
    // Predicated region
    $region6: #{tpu_custom_call.1} parent=1 // pred_check
      _
    $region7: #{tpu_custom_call.1} parent=1 // pred_check_branch
      %26 = sbr.rel (0) target = $region9
    $region8: #{tpu_custom_call.1} parent=1 // pred_region
      %28 = vsyncadd [#allocation6], 0
      %s29 = sshll.u32 %s1, 4
      %s30 = int_to_ptr.hbm [resolvable:$true] %s29
      %s31 = sshll.u32 [#allocation5], 4
      %s32 = int_to_ptr.vmem [resolvable:$true] %s31
      %37 = dma.hbm_to_vmem [thread:$0]  %s30, 2048, %s32, [#allocation6], 256, 256, 16
    $region9: #{tpu_custom_call.1} parent=1 // pred_fallthru
      _
    // Predicated region
    $region10: #{tpu_custom_call.1} parent=1 // pred_check
      _
    $region11: #{tpu_custom_call.1} parent=1 // pred_check_branch
      %39 = sbr.rel (0) target = $region13
    $region12: #{tpu_custom_call.1} parent=1 // pred_region
      _
    $region13: #{tpu_custom_call.1} parent=1 // pred_fallthru
      _
    // Predicated region
    $region14: #{tpu_custom_call.1} parent=1 // pred_check
      _
    $region15: #{tpu_custom_call.1} parent=1 // pred_check_branch
      %41 = sbr.rel (0) target = $region17
    $region16: #{tpu_custom_call.1} parent=1 // pred_region
      _
    $region17: #{tpu_custom_call.1} parent=1 // pred_fallthru
      _
    // Predicated region
    $region18: #{tpu_custom_call.1} parent=1 // pred_check
      _
    $region19: #{tpu_custom_call.1} parent=1 // pred_check_branch
      %43 = sbr.rel (0) target = $region21
    $region20: #{tpu_custom_call.1} parent=1 // pred_region
      %45 = dma.done [#allocation3], 2048
    $region21: #{tpu_custom_call.1} parent=1 // pred_fallthru
      _
    // Predicated region
    $region22: #{tpu_custom_call.1} parent=1 // pred_check
      _
    $region23: #{tpu_custom_call.1} parent=1 // pred_check_branch
      %47 = sbr.rel (0) target = $region25
    $region24: #{tpu_custom_call.1} parent=1 // pred_region
      %49 = dma.done [#allocation6], 2048
    $region25: #{tpu_custom_call.1} parent=1 // pred_fallthru
      _
    %v50 = vld [vmem:[%s2] sm:$0xff]
    %v51 = vld [vmem:[%s2 + $0x8] sm:$0xff]
    %v52 = vld [vmem:[%s2 + $0x10] sm:$0xff]
    %v53 = vld [vmem:[%s2 + $0x18] sm:$0xff]
    %v54 = vld [vmem:[%s2 + $0x20] sm:$0xff]
    %v55 = vld [vmem:[%s2 + $0x28] sm:$0xff]
    %v56 = vld [vmem:[%s2 + $0x30] sm:$0xff]
    %v57 = vld [vmem:[%s2 + $0x38] sm:$0xff]
    %v58 = vld [vmem:[%s3] sm:$0xff]
    %v59 = vld [vmem:[%s3 + $0x8] sm:$0xff]
    %v60 = vld [vmem:[%s3 + $0x10] sm:$0xff]
    %v61 = vld [vmem:[%s3 + $0x18] sm:$0xff]
    %v62 = vld [vmem:[%s3 + $0x20] sm:$0xff]
    %v63 = vld [vmem:[%s3 + $0x28] sm:$0xff]
    %v64 = vld [vmem:[%s3 + $0x30] sm:$0xff]
    %v65 = vld [vmem:[%s3 + $0x38] sm:$0xff]
    %v66 = vld [vmem:[#allocation2] sm:$0xff]
    %v67 = vld [vmem:[#allocation2 + $0x8] sm:$0xff]
    %v68 = vld [vmem:[#allocation2 + $0x10] sm:$0xff]
    %v69 = vld [vmem:[#allocation2 + $0x18] sm:$0xff]
    %v70 = vld [vmem:[#allocation2 + $0x20] sm:$0xff]
    %v71 = vld [vmem:[#allocation2 + $0x28] sm:$0xff]
    %v72 = vld [vmem:[#allocation2 + $0x30] sm:$0xff]
    %v73 = vld [vmem:[#allocation2 + $0x38] sm:$0xff]
    %v74 = vld [vmem:[#allocation2 + $0x40] sm:$0xff]
    %v75 = vld [vmem:[#allocation2 + $0x48] sm:$0xff]
    %v76 = vld [vmem:[#allocation2 + $0x50] sm:$0xff]
    %v77 = vld [vmem:[#allocation2 + $0x58] sm:$0xff]
    %v78 = vld [vmem:[#allocation2 + $0x60] sm:$0xff]
    %v79 = vld [vmem:[#allocation2 + $0x68] sm:$0xff]
    %v80 = vld [vmem:[#allocation2 + $0x70] sm:$0xff]
    %v81 = vld [vmem:[#allocation2 + $0x78] sm:$0xff]
    %v82 = vld [vmem:[#allocation5] sm:$0xff]
    %v83 = vld [vmem:[#allocation5 + $0x8] sm:$0xff]
    %v84 = vld [vmem:[#allocation5 + $0x10] sm:$0xff]
    %v85 = vld [vmem:[#allocation5 + $0x18] sm:$0xff]
    %v86 = vld [vmem:[#allocation5 + $0x20] sm:$0xff]
    %v87 = vld [vmem:[#allocation5 + $0x28] sm:$0xff]
    %v88 = vld [vmem:[#allocation5 + $0x30] sm:$0xff]
    %v89 = vld [vmem:[#allocation5 + $0x38] sm:$0xff]
    %v90 = vld [vmem:[#allocation5 + $0x40] sm:$0xff]
    %v91 = vld [vmem:[#allocation5 + $0x48] sm:$0xff]
    %v92 = vld [vmem:[#allocation5 + $0x50] sm:$0xff]
    %v93 = vld [vmem:[#allocation5 + $0x58] sm:$0xff]
    %v94 = vld [vmem:[#allocation5 + $0x60] sm:$0xff]
    %v95 = vld [vmem:[#allocation5 + $0x68] sm:$0xff]
    %v96 = vld [vmem:[#allocation5 + $0x70] sm:$0xff]
    %v97 = vld [vmem:[#allocation5 + $0x78] sm:$0xff]
    %99 = vset.pattern.permute.xlu0 0
    %100 = vperm.xlu0 %99, %v50
    %v101 = vpop.permute.xlu0 %100
    %104 = vset.pattern.permute.xlu0 0
    %105 = vperm.xlu0 %104, %v51
    %v106 = vpop.permute.xlu0 %105
    %109 = vset.pattern.permute.xlu0 0
    %110 = vperm.xlu0 %109, %v52
    %v111 = vpop.permute.xlu0 %110
    %114 = vset.pattern.permute.xlu0 0
    %115 = vperm.xlu0 %114, %v53
    %v116 = vpop.permute.xlu0 %115
    %119 = vset.pattern.permute.xlu0 0
    %120 = vperm.xlu0 %119, %v54
    %v121 = vpop.permute.xlu0 %120
    %124 = vset.pattern.permute.xlu0 0
    %125 = vperm.xlu0 %124, %v55
    %v126 = vpop.permute.xlu0 %125
    %129 = vset.pattern.permute.xlu0 0
    %130 = vperm.xlu0 %129, %v56
    %v131 = vpop.permute.xlu0 %130
    %134 = vset.pattern.permute.xlu0 0
    %135 = vperm.xlu0 %134, %v57
    %v136 = vpop.permute.xlu0 %135
    %v138 = vmul.f32 %v101, %v66
    %v139 = vmul.f32 %v101, %v67
    %v140 = vmul.f32 %v106, %v68
    %v141 = vmul.f32 %v106, %v69
    %v142 = vmul.f32 %v111, %v70
    %v143 = vmul.f32 %v111, %v71
    %v144 = vmul.f32 %v116, %v72
    %v145 = vmul.f32 %v116, %v73
    %v146 = vmul.f32 %v121, %v74
    %v147 = vmul.f32 %v121, %v75
    %v148 = vmul.f32 %v126, %v76
    %v149 = vmul.f32 %v126, %v77
    %v150 = vmul.f32 %v131, %v78
    %v151 = vmul.f32 %v131, %v79
    %v152 = vmul.f32 %v136, %v80
    %v153 = vmul.f32 %v136, %v81
    %154 = vset.pattern.permute.xlu0 1
    %155 = vperm.xlu0 %154, %v50
    %v156 = vpop.permute.xlu0 %155
    %158 = vset.pattern.permute.xlu0 1
    %159 = vperm.xlu0 %158, %v51
    %v160 = vpop.permute.xlu0 %159
    %162 = vset.pattern.permute.xlu0 1
    %163 = vperm.xlu0 %162, %v52
    %v164 = vpop.permute.xlu0 %163
    %166 = vset.pattern.permute.xlu0 1
    %167 = vperm.xlu0 %166, %v53
    %v168 = vpop.permute.xlu0 %167
    %170 = vset.pattern.permute.xlu0 1
    %171 = vperm.xlu0 %170, %v54
    %v172 = vpop.permute.xlu0 %171
    %174 = vset.pattern.permute.xlu0 1
    %175 = vperm.xlu0 %174, %v55
    %v176 = vpop.permute.xlu0 %175
    %178 = vset.pattern.permute.xlu0 1
    %179 = vperm.xlu0 %178, %v56
    %v180 = vpop.permute.xlu0 %179
    %182 = vset.pattern.permute.xlu0 1
    %183 = vperm.xlu0 %182, %v57
    %v184 = vpop.permute.xlu0 %183
    %v186 = vadd.f32 %v138, %v156
    %v187 = vadd.f32 %v139, %v156
    %v188 = vadd.f32 %v140, %v160
    %v189 = vadd.f32 %v141, %v160
    %v190 = vadd.f32 %v142, %v164
    %v191 = vadd.f32 %v143, %v164
    %v192 = vadd.f32 %v144, %v168
    %v193 = vadd.f32 %v145, %v168
    %v194 = vadd.f32 %v146, %v172
    %v195 = vadd.f32 %v147, %v172
    %v196 = vadd.f32 %v148, %v176
    %v197 = vadd.f32 %v149, %v176
    %v198 = vadd.f32 %v150, %v180
    %v199 = vadd.f32 %v151, %v180
    %v200 = vadd.f32 %v152, %v184
    %v201 = vadd.f32 %v153, %v184
    %202 = vset.pattern.permute.xlu0 2
    %203 = vperm.xlu0 %202, %v50
    %v204 = vpop.permute.xlu0 %203
    %206 = vset.pattern.permute.xlu0 2
    %207 = vperm.xlu0 %206, %v51
    %v208 = vpop.permute.xlu0 %207
    %210 = vset.pattern.permute.xlu0 2
    %211 = vperm.xlu0 %210, %v52
    %v212 = vpop.permute.xlu0 %211
    %214 = vset.pattern.permute.xlu0 2
    %215 = vperm.xlu0 %214, %v53
    %v216 = vpop.permute.xlu0 %215
    %218 = vset.pattern.permute.xlu0 2
    %219 = vperm.xlu0 %218, %v54
    %v220 = vpop.permute.xlu0 %219
    %222 = vset.pattern.permute.xlu0 2
    %223 = vperm.xlu0 %222, %v55
    %v224 = vpop.permute.xlu0 %223
    %226 = vset.pattern.permute.xlu0 2
    %227 = vperm.xlu0 %226, %v56
    %v228 = vpop.permute.xlu0 %227
    %230 = vset.pattern.permute.xlu0 2
    %231 = vperm.xlu0 %230, %v57
    %v232 = vpop.permute.xlu0 %231
    %v234 = vmul.f32 %v204, %v66
    %v235 = vmul.f32 %v204, %v67
    %v236 = vmul.f32 %v208, %v68
    %v237 = vmul.f32 %v208, %v69
    %v238 = vmul.f32 %v212, %v70
    %v239 = vmul.f32 %v212, %v71
    %v240 = vmul.f32 %v216, %v72
    %v241 = vmul.f32 %v216, %v73
    %v242 = vmul.f32 %v220, %v74
    %v243 = vmul.f32 %v220, %v75
    %v244 = vmul.f32 %v224, %v76
    %v245 = vmul.f32 %v224, %v77
    %v246 = vmul.f32 %v228, %v78
    %v247 = vmul.f32 %v228, %v79
    %v248 = vmul.f32 %v232, %v80
    %v249 = vmul.f32 %v232, %v81
    %250 = vset.pattern.permute.xlu0 3
    %251 = vperm.xlu0 %250, %v50
    %v252 = vpop.permute.xlu0 %251
    %254 = vset.pattern.permute.xlu0 3
    %255 = vperm.xlu0 %254, %v51
    %v256 = vpop.permute.xlu0 %255
    %258 = vset.pattern.permute.xlu0 3
    %259 = vperm.xlu0 %258, %v52
    %v260 = vpop.permute.xlu0 %259
    %262 = vset.pattern.permute.xlu0 3
    %263 = vperm.xlu0 %262, %v53
    %v264 = vpop.permute.xlu0 %263
    %266 = vset.pattern.permute.xlu0 3
    %267 = vperm.xlu0 %266, %v54
    %v268 = vpop.permute.xlu0 %267
    %270 = vset.pattern.permute.xlu0 3
    %271 = vperm.xlu0 %270, %v55
    %v272 = vpop.permute.xlu0 %271
    %274 = vset.pattern.permute.xlu0 3
    %275 = vperm.xlu0 %274, %v56
    %v276 = vpop.permute.xlu0 %275
    %278 = vset.pattern.permute.xlu0 3
    %279 = vperm.xlu0 %278, %v57
    %v280 = vpop.permute.xlu0 %279
    %v282 = vadd.f32 %v234, %v252
    %v283 = vadd.f32 %v235, %v252
    %v284 = vadd.f32 %v236, %v256
    %v285 = vadd.f32 %v237, %v256
    %v286 = vadd.f32 %v238, %v260
    %v287 = vadd.f32 %v239, %v260
    %v288 = vadd.f32 %v240, %v264
    %v289 = vadd.f32 %v241, %v264
    %v290 = vadd.f32 %v242, %v268
    %v291 = vadd.f32 %v243, %v268
    %v292 = vadd.f32 %v244, %v272
    %v293 = vadd.f32 %v245, %v272
    %v294 = vadd.f32 %v246, %v276
    %v295 = vadd.f32 %v247, %v276
    %v296 = vadd.f32 %v248, %v280
    %v297 = vadd.f32 %v249, %v280
    %298 = vset.pattern.permute.xlu0 4
    %299 = vperm.xlu0 %298, %v50
    %v300 = vpop.permute.xlu0 %299
    %302 = vset.pattern.permute.xlu0 4
    %303 = vperm.xlu0 %302, %v51
    %v304 = vpop.permute.xlu0 %303
    %306 = vset.pattern.permute.xlu0 4
    %307 = vperm.xlu0 %306, %v52
    %v308 = vpop.permute.xlu0 %307
    %310 = vset.pattern.permute.xlu0 4
    %311 = vperm.xlu0 %310, %v53
    %v312 = vpop.permute.xlu0 %311
    %314 = vset.pattern.permute.xlu0 4
    %315 = vperm.xlu0 %314, %v54
    %v316 = vpop.permute.xlu0 %315
    %318 = vset.pattern.permute.xlu0 4
    %319 = vperm.xlu0 %318, %v55
    %v320 = vpop.permute.xlu0 %319
    %322 = vset.pattern.permute.xlu0 4
    %323 = vperm.xlu0 %322, %v56
    %v324 = vpop.permute.xlu0 %323
    %326 = vset.pattern.permute.xlu0 4
    %327 = vperm.xlu0 %326, %v57
    %v328 = vpop.permute.xlu0 %327
    %v330 = vmul.f32 %v300, %v66
    %v331 = vmul.f32 %v300, %v67
    %v332 = vmul.f32 %v304, %v68
    %v333 = vmul.f32 %v304, %v69
    %v334 = vmul.f32 %v308, %v70
    %v335 = vmul.f32 %v308, %v71
    %v336 = vmul.f32 %v312, %v72
    %v337 = vmul.f32 %v312, %v73
    %v338 = vmul.f32 %v316, %v74
    %v339 = vmul.f32 %v316, %v75
    %v340 = vmul.f32 %v320, %v76
    %v341 = vmul.f32 %v320, %v77
    %v342 = vmul.f32 %v324, %v78
    %v343 = vmul.f32 %v324, %v79
    %v344 = vmul.f32 %v328, %v80
    %v345 = vmul.f32 %v328, %v81
    %346 = vset.pattern.permute.xlu0 5
    %347 = vperm.xlu0 %346, %v50
    %v348 = vpop.permute.xlu0 %347
    %350 = vset.pattern.permute.xlu0 5
    %351 = vperm.xlu0 %350, %v51
    %v352 = vpop.permute.xlu0 %351
    %354 = vset.pattern.permute.xlu0 5
    %355 = vperm.xlu0 %354, %v52
    %v356 = vpop.permute.xlu0 %355
    %358 = vset.pattern.permute.xlu0 5
    %359 = vperm.xlu0 %358, %v53
    %v360 = vpop.permute.xlu0 %359
    %362 = vset.pattern.permute.xlu0 5
    %363 = vperm.xlu0 %362, %v54
    %v364 = vpop.permute.xlu0 %363
    %366 = vset.pattern.permute.xlu0 5
    %367 = vperm.xlu0 %366, %v55
    %v368 = vpop.permute.xlu0 %367
    %370 = vset.pattern.permute.xlu0 5
    %371 = vperm.xlu0 %370, %v56
    %v372 = vpop.permute.xlu0 %371
    %374 = vset.pattern.permute.xlu0 5
    %375 = vperm.xlu0 %374, %v57
    %v376 = vpop.permute.xlu0 %375
    %v378 = vadd.f32 %v330, %v348
    %v379 = vadd.f32 %v331, %v348
    %v380 = vadd.f32 %v332, %v352
    %v381 = vadd.f32 %v333, %v352
    %v382 = vadd.f32 %v334, %v356
    %v383 = vadd.f32 %v335, %v356
    %v384 = vadd.f32 %v336, %v360
    %v385 = vadd.f32 %v337, %v360
    %v386 = vadd.f32 %v338, %v364
    %v387 = vadd.f32 %v339, %v364
    %v388 = vadd.f32 %v340, %v368
    %v389 = vadd.f32 %v341, %v368
    %v390 = vadd.f32 %v342, %v372
    %v391 = vadd.f32 %v343, %v372
    %v392 = vadd.f32 %v344, %v376
    %v393 = vadd.f32 %v345, %v376
    %394 = vset.pattern.permute.xlu0 6
    %395 = vperm.xlu0 %394, %v50
    %v396 = vpop.permute.xlu0 %395
    %398 = vset.pattern.permute.xlu0 6
    %399 = vperm.xlu0 %398, %v51
    %v400 = vpop.permute.xlu0 %399
    %402 = vset.pattern.permute.xlu0 6
    %403 = vperm.xlu0 %402, %v52
    %v404 = vpop.permute.xlu0 %403
    %406 = vset.pattern.permute.xlu0 6
    %407 = vperm.xlu0 %406, %v53
    %v408 = vpop.permute.xlu0 %407
    %410 = vset.pattern.permute.xlu0 6
    %411 = vperm.xlu0 %410, %v54
    %v412 = vpop.permute.xlu0 %411
    %414 = vset.pattern.permute.xlu0 6
    %415 = vperm.xlu0 %414, %v55
    %v416 = vpop.permute.xlu0 %415
    %418 = vset.pattern.permute.xlu0 6
    %419 = vperm.xlu0 %418, %v56
    %v420 = vpop.permute.xlu0 %419
    %422 = vset.pattern.permute.xlu0 6
    %423 = vperm.xlu0 %422, %v57
    %v424 = vpop.permute.xlu0 %423
    %v426 = vmul.f32 %v396, %v82
    %v427 = vmul.f32 %v396, %v83
    %v428 = vmul.f32 %v400, %v84
    %v429 = vmul.f32 %v400, %v85
    %v430 = vmul.f32 %v404, %v86
    %v431 = vmul.f32 %v404, %v87
    %v432 = vmul.f32 %v408, %v88
    %v433 = vmul.f32 %v408, %v89
    %v434 = vmul.f32 %v412, %v90
    %v435 = vmul.f32 %v412, %v91
    %v436 = vmul.f32 %v416, %v92
    %v437 = vmul.f32 %v416, %v93
    %v438 = vmul.f32 %v420, %v94
    %v439 = vmul.f32 %v420, %v95
    %v440 = vmul.f32 %v424, %v96
    %v441 = vmul.f32 %v424, %v97
    %442 = vset.pattern.permute.xlu0 7
    %443 = vperm.xlu0 %442, %v50
    %v444 = vpop.permute.xlu0 %443
    %446 = vset.pattern.permute.xlu0 7
    %447 = vperm.xlu0 %446, %v51
    %v448 = vpop.permute.xlu0 %447
    %450 = vset.pattern.permute.xlu0 7
    %451 = vperm.xlu0 %450, %v52
    %v452 = vpop.permute.xlu0 %451
    %454 = vset.pattern.permute.xlu0 7
    %455 = vperm.xlu0 %454, %v53
    %v456 = vpop.permute.xlu0 %455
    %458 = vset.pattern.permute.xlu0 7
    %459 = vperm.xlu0 %458, %v54
    %v460 = vpop.permute.xlu0 %459
    %462 = vset.pattern.permute.xlu0 7
    %463 = vperm.xlu0 %462, %v55
    %v464 = vpop.permute.xlu0 %463
    %466 = vset.pattern.permute.xlu0 7
    %467 = vperm.xlu0 %466, %v56
    %v468 = vpop.permute.xlu0 %467
    %470 = vset.pattern.permute.xlu0 7
    %471 = vperm.xlu0 %470, %v57
    %v472 = vpop.permute.xlu0 %471
    %v474 = vadd.f32 %v426, %v444
    %v475 = vadd.f32 %v427, %v444
    %v476 = vadd.f32 %v428, %v448
    %v477 = vadd.f32 %v429, %v448
    %v478 = vadd.f32 %v430, %v452
    %v479 = vadd.f32 %v431, %v452
    %v480 = vadd.f32 %v432, %v456
    %v481 = vadd.f32 %v433, %v456
    %v482 = vadd.f32 %v434, %v460
    %v483 = vadd.f32 %v435, %v460
    %v484 = vadd.f32 %v436, %v464
    %v485 = vadd.f32 %v437, %v464
    %v486 = vadd.f32 %v438, %v468
    %v487 = vadd.f32 %v439, %v468
    %v488 = vadd.f32 %v440, %v472
    %v489 = vadd.f32 %v441, %v472
    %490 = vset.pattern.permute.xlu0 8
    %491 = vperm.xlu0 %490, %v50
    %v492 = vpop.permute.xlu0 %491
    %494 = vset.pattern.permute.xlu0 8
    %495 = vperm.xlu0 %494, %v51
    %v496 = vpop.permute.xlu0 %495
    %498 = vset.pattern.permute.xlu0 8
    %499 = vperm.xlu0 %498, %v52
    %v500 = vpop.permute.xlu0 %499
    %502 = vset.pattern.permute.xlu0 8
    %503 = vperm.xlu0 %502, %v53
    %v504 = vpop.permute.xlu0 %503
    %506 = vset.pattern.permute.xlu0 8
    %507 = vperm.xlu0 %506, %v54
    %v508 = vpop.permute.xlu0 %507
    %510 = vset.pattern.permute.xlu0 8
    %511 = vperm.xlu0 %510, %v55
    %v512 = vpop.permute.xlu0 %511
    %514 = vset.pattern.permute.xlu0 8
    %515 = vperm.xlu0 %514, %v56
    %v516 = vpop.permute.xlu0 %515
    %518 = vset.pattern.permute.xlu0 8
    %519 = vperm.xlu0 %518, %v57
    %v520 = vpop.permute.xlu0 %519
    %v522 = vmul.f32 %v492, %v82
    %v523 = vmul.f32 %v492, %v83
    %v524 = vmul.f32 %v496, %v84
    %v525 = vmul.f32 %v496, %v85
    %v526 = vmul.f32 %v500, %v86
    %v527 = vmul.f32 %v500, %v87
    %v528 = vmul.f32 %v504, %v88
    %v529 = vmul.f32 %v504, %v89
    %v530 = vmul.f32 %v508, %v90
    %v531 = vmul.f32 %v508, %v91
    %v532 = vmul.f32 %v512, %v92
    %v533 = vmul.f32 %v512, %v93
    %v534 = vmul.f32 %v516, %v94
    %v535 = vmul.f32 %v516, %v95
    %v536 = vmul.f32 %v520, %v96
    %v537 = vmul.f32 %v520, %v97
    %538 = vset.pattern.permute.xlu0 9
    %539 = vperm.xlu0 %538, %v50
    %v540 = vpop.permute.xlu0 %539
    %542 = vset.pattern.permute.xlu0 9
    %543 = vperm.xlu0 %542, %v51
    %v544 = vpop.permute.xlu0 %543
    %546 = vset.pattern.permute.xlu0 9
    %547 = vperm.xlu0 %546, %v52
    %v548 = vpop.permute.xlu0 %547
    %550 = vset.pattern.permute.xlu0 9
    %551 = vperm.xlu0 %550, %v53
    %v552 = vpop.permute.xlu0 %551
    %554 = vset.pattern.permute.xlu0 9
    %555 = vperm.xlu0 %554, %v54
    %v556 = vpop.permute.xlu0 %555
    %558 = vset.pattern.permute.xlu0 9
    %559 = vperm.xlu0 %558, %v55
    %v560 = vpop.permute.xlu0 %559
    %562 = vset.pattern.permute.xlu0 9
    %563 = vperm.xlu0 %562, %v56
    %v564 = vpop.permute.xlu0 %563
    %566 = vset.pattern.permute.xlu0 9
    %567 = vperm.xlu0 %566, %v57
    %v568 = vpop.permute.xlu0 %567
    %v570 = vadd.f32 %v522, %v540
    %v571 = vadd.f32 %v523, %v540
    %v572 = vadd.f32 %v524, %v544
    %v573 = vadd.f32 %v525, %v544
    %v574 = vadd.f32 %v526, %v548
    %v575 = vadd.f32 %v527, %v548
    %v576 = vadd.f32 %v528, %v552
    %v577 = vadd.f32 %v529, %v552
    %v578 = vadd.f32 %v530, %v556
    %v579 = vadd.f32 %v531, %v556
    %v580 = vadd.f32 %v532, %v560
    %v581 = vadd.f32 %v533, %v560
    %v582 = vadd.f32 %v534, %v564
    %v583 = vadd.f32 %v535, %v564
    %v584 = vadd.f32 %v536, %v568
    %v585 = vadd.f32 %v537, %v568
    %v586 = vmul.f32 %v186, %v186
    %v587 = vmul.f32 %v187, %v187
    %v588 = vmul.f32 %v188, %v188
    %v589 = vmul.f32 %v189, %v189
    %v590 = vmul.f32 %v190, %v190
    %v591 = vmul.f32 %v191, %v191
    %v592 = vmul.f32 %v192, %v192
    %v593 = vmul.f32 %v193, %v193
    %v594 = vmul.f32 %v194, %v194
    %v595 = vmul.f32 %v195, %v195
    %v596 = vmul.f32 %v196, %v196
    %v597 = vmul.f32 %v197, %v197
    %v598 = vmul.f32 %v198, %v198
    %v599 = vmul.f32 %v199, %v199
    %v600 = vmul.f32 %v200, %v200
    %v601 = vmul.f32 %v201, %v201
    %v602 = vadd.f32 %v586, %v587
    %603 = vadd.xlane.f32.xlu0 %v602
    %v604 = vpop.xlane.xlu0 %603
    %v605 = vadd.f32 %v588, %v589
    %606 = vadd.xlane.f32.xlu0 %v605
    %v607 = vpop.xlane.xlu0 %606
    %v608 = vadd.f32 %v590, %v591
    %609 = vadd.xlane.f32.xlu0 %v608
    %v610 = vpop.xlane.xlu0 %609
    %v611 = vadd.f32 %v592, %v593
    %612 = vadd.xlane.f32.xlu0 %v611
    %v613 = vpop.xlane.xlu0 %612
    %v614 = vadd.f32 %v594, %v595
    %615 = vadd.xlane.f32.xlu0 %v614
    %v616 = vpop.xlane.xlu0 %615
    %v617 = vadd.f32 %v596, %v597
    %618 = vadd.xlane.f32.xlu0 %v617
    %v619 = vpop.xlane.xlu0 %618
    %v620 = vadd.f32 %v598, %v599
    %621 = vadd.xlane.f32.xlu0 %v620
    %v622 = vpop.xlane.xlu0 %621
    %v623 = vadd.f32 %v600, %v601
    %624 = vadd.xlane.f32.xlu0 %v623
    %v625 = vpop.xlane.xlu0 %624
    %v626 = vmax.f32 %v604, 1e-24
    %v627 = vmax.f32 %v607, 1e-24
    %v628 = vmax.f32 %v610, 1e-24
    %v629 = vmax.f32 %v613, 1e-24
    %v630 = vmax.f32 %v616, 1e-24
    %v631 = vmax.f32 %v619, 1e-24
    %v632 = vmax.f32 %v622, 1e-24
    %v633 = vmax.f32 %v625, 1e-24
    %v634 = vrsqrt.pop %v626
    %v635 = vmul.f32 %v634, %v626
    %v636 = vmul.f32 %v635, %v634
    %v637 = vmul.f32 0.5, %v636
    %v638 = vsub.f32 1.5, %v637
    %v639 = vmul.f32 %v634, %v638
    %vm640 = vweird.f32 %v626
    %vm641 = vweird.f32 %v634
    %vm642 = vmor %vm640, %vm641
    %v643 = vsel %vm642, %v634, %v639
    %v644 = vrsqrt.pop %v627
    %v645 = vmul.f32 %v644, %v627
    %v646 = vmul.f32 %v645, %v644
    %v647 = vmul.f32 0.5, %v646
    %v648 = vsub.f32 1.5, %v647
    %v649 = vmul.f32 %v644, %v648
    %vm650 = vweird.f32 %v627
    %vm651 = vweird.f32 %v644
    %vm652 = vmor %vm650, %vm651
    %v653 = vsel %vm652, %v644, %v649
    %v654 = vrsqrt.pop %v628
    %v655 = vmul.f32 %v654, %v628
    %v656 = vmul.f32 %v655, %v654
    %v657 = vmul.f32 0.5, %v656
    %v658 = vsub.f32 1.5, %v657
    %v659 = vmul.f32 %v654, %v658
    %vm660 = vweird.f32 %v628
    %vm661 = vweird.f32 %v654
    %vm662 = vmor %vm660, %vm661
    %v663 = vsel %vm662, %v654, %v659
    %v664 = vrsqrt.pop %v629
    %v665 = vmul.f32 %v664, %v629
    %v666 = vmul.f32 %v665, %v664
    %v667 = vmul.f32 0.5, %v666
    %v668 = vsub.f32 1.5, %v667
    %v669 = vmul.f32 %v664, %v668
    %vm670 = vweird.f32 %v629
    %vm671 = vweird.f32 %v664
    %vm672 = vmor %vm670, %vm671
    %v673 = vsel %vm672, %v664, %v669
    %v674 = vrsqrt.pop %v630
    %v675 = vmul.f32 %v674, %v630
    %v676 = vmul.f32 %v675, %v674
    %v677 = vmul.f32 0.5, %v676
    %v678 = vsub.f32 1.5, %v677
    %v679 = vmul.f32 %v674, %v678
    %vm680 = vweird.f32 %v630
    %vm681 = vweird.f32 %v674
    %vm682 = vmor %vm680, %vm681
    %v683 = vsel %vm682, %v674, %v679
    %v684 = vrsqrt.pop %v631
    %v685 = vmul.f32 %v684, %v631
    %v686 = vmul.f32 %v685, %v684
    %v687 = vmul.f32 0.5, %v686
    %v688 = vsub.f32 1.5, %v687
    %v689 = vmul.f32 %v684, %v688
    %vm690 = vweird.f32 %v631
    %vm691 = vweird.f32 %v684
    %vm692 = vmor %vm690, %vm691
    %v693 = vsel %vm692, %v684, %v689
    %v694 = vrsqrt.pop %v632
    %v695 = vmul.f32 %v694, %v632
    %v696 = vmul.f32 %v695, %v694
    %v697 = vmul.f32 0.5, %v696
    %v698 = vsub.f32 1.5, %v697
    %v699 = vmul.f32 %v694, %v698
    %vm700 = vweird.f32 %v632
    %vm701 = vweird.f32 %v694
    %vm702 = vmor %vm700, %vm701
    %v703 = vsel %vm702, %v694, %v699
    %v704 = vrsqrt.pop %v633
    %v705 = vmul.f32 %v704, %v633
    %v706 = vmul.f32 %v705, %v704
    %v707 = vmul.f32 0.5, %v706
    %v708 = vsub.f32 1.5, %v707
    %v709 = vmul.f32 %v704, %v708
    %vm710 = vweird.f32 %v633
    %vm711 = vweird.f32 %v704
    %vm712 = vmor %vm710, %vm711
    %v713 = vsel %vm712, %v704, %v709
    %v714 = vmul.f32 %v186, %v643
    %v715 = vmul.f32 %v187, %v643
    %v716 = vmul.f32 %v188, %v653
    %v717 = vmul.f32 %v189, %v653
    %v718 = vmul.f32 %v190, %v663
    %v719 = vmul.f32 %v191, %v663
    %v720 = vmul.f32 %v192, %v673
    %v721 = vmul.f32 %v193, %v673
    %v722 = vmul.f32 %v194, %v683
    %v723 = vmul.f32 %v195, %v683
    %v724 = vmul.f32 %v196, %v693
    %v725 = vmul.f32 %v197, %v693
    %v726 = vmul.f32 %v198, %v703
    %v727 = vmul.f32 %v199, %v703
    %v728 = vmul.f32 %v200, %v713
    %v729 = vmul.f32 %v201, %v713
    %730 = vset.pattern.permute.xlu0 12
    %731 = vperm.xlu0 %730, %v50
    %v732 = vpop.permute.xlu0 %731
    %734 = vset.pattern.permute.xlu0 12
    %735 = vperm.xlu0 %734, %v51
    %v736 = vpop.permute.xlu0 %735
    %738 = vset.pattern.permute.xlu0 12
    %739 = vperm.xlu0 %738, %v52
    %v740 = vpop.permute.xlu0 %739
    %742 = vset.pattern.permute.xlu0 12
    %743 = vperm.xlu0 %742, %v53
    %v744 = vpop.permute.xlu0 %743
    %746 = vset.pattern.permute.xlu0 12
    %747 = vperm.xlu0 %746, %v54
    %v748 = vpop.permute.xlu0 %747
    %750 = vset.pattern.permute.xlu0 12
    %751 = vperm.xlu0 %750, %v55
    %v752 = vpop.permute.xlu0 %751
    %754 = vset.pattern.permute.xlu0 12
    %755 = vperm.xlu0 %754, %v56
    %v756 = vpop.permute.xlu0 %755
    %758 = vset.pattern.permute.xlu0 12
    %759 = vperm.xlu0 %758, %v57
    %v760 = vpop.permute.xlu0 %759
    %v762 = vmul.f32 %v714, %v732
    %v763 = vmul.f32 %v715, %v732
    %v764 = vmul.f32 %v716, %v736
    %v765 = vmul.f32 %v717, %v736
    %v766 = vmul.f32 %v718, %v740
    %v767 = vmul.f32 %v719, %v740
    %v768 = vmul.f32 %v720, %v744
    %v769 = vmul.f32 %v721, %v744
    %v770 = vmul.f32 %v722, %v748
    %v771 = vmul.f32 %v723, %v748
    %v772 = vmul.f32 %v724, %v752
    %v773 = vmul.f32 %v725, %v752
    %v774 = vmul.f32 %v726, %v756
    %v775 = vmul.f32 %v727, %v756
    %v776 = vmul.f32 %v728, %v760
    %v777 = vmul.f32 %v729, %v760
    %v778 = vmul.f32 %v282, %v282
    %v779 = vmul.f32 %v283, %v283
    %v780 = vmul.f32 %v284, %v284
    %v781 = vmul.f32 %v285, %v285
    %v782 = vmul.f32 %v286, %v286
    %v783 = vmul.f32 %v287, %v287
    %v784 = vmul.f32 %v288, %v288
    %v785 = vmul.f32 %v289, %v289
    %v786 = vmul.f32 %v290, %v290
    %v787 = vmul.f32 %v291, %v291
    %v788 = vmul.f32 %v292, %v292
    %v789 = vmul.f32 %v293, %v293
    %v790 = vmul.f32 %v294, %v294
    %v791 = vmul.f32 %v295, %v295
    %v792 = vmul.f32 %v296, %v296
    %v793 = vmul.f32 %v297, %v297
    %v794 = vadd.f32 %v778, %v779
    %795 = vadd.xlane.f32.xlu0 %v794
    %v796 = vpop.xlane.xlu0 %795
    %v797 = vadd.f32 %v780, %v781
    %798 = vadd.xlane.f32.xlu0 %v797
    %v799 = vpop.xlane.xlu0 %798
    %v800 = vadd.f32 %v782, %v783
    %801 = vadd.xlane.f32.xlu0 %v800
    %v802 = vpop.xlane.xlu0 %801
    %v803 = vadd.f32 %v784, %v785
    %804 = vadd.xlane.f32.xlu0 %v803
    %v805 = vpop.xlane.xlu0 %804
    %v806 = vadd.f32 %v786, %v787
    %807 = vadd.xlane.f32.xlu0 %v806
    %v808 = vpop.xlane.xlu0 %807
    %v809 = vadd.f32 %v788, %v789
    %810 = vadd.xlane.f32.xlu0 %v809
    %v811 = vpop.xlane.xlu0 %810
    %v812 = vadd.f32 %v790, %v791
    %813 = vadd.xlane.f32.xlu0 %v812
    %v814 = vpop.xlane.xlu0 %813
    %v815 = vadd.f32 %v792, %v793
    %816 = vadd.xlane.f32.xlu0 %v815
    %v817 = vpop.xlane.xlu0 %816
    %v818 = vmax.f32 %v796, 1e-24
    %v819 = vmax.f32 %v799, 1e-24
    %v820 = vmax.f32 %v802, 1e-24
    %v821 = vmax.f32 %v805, 1e-24
    %v822 = vmax.f32 %v808, 1e-24
    %v823 = vmax.f32 %v811, 1e-24
    %v824 = vmax.f32 %v814, 1e-24
    %v825 = vmax.f32 %v817, 1e-24
    %v826 = vrsqrt.pop %v818
    %v827 = vmul.f32 %v826, %v818
    %v828 = vmul.f32 %v827, %v826
    %v829 = vmul.f32 0.5, %v828
    %v830 = vsub.f32 1.5, %v829
    %v831 = vmul.f32 %v826, %v830
    %vm832 = vweird.f32 %v818
    %vm833 = vweird.f32 %v826
    %vm834 = vmor %vm832, %vm833
    %v835 = vsel %vm834, %v826, %v831
    %v836 = vrsqrt.pop %v819
    %v837 = vmul.f32 %v836, %v819
    %v838 = vmul.f32 %v837, %v836
    %v839 = vmul.f32 0.5, %v838
    %v840 = vsub.f32 1.5, %v839
    %v841 = vmul.f32 %v836, %v840
    %vm842 = vweird.f32 %v819
    %vm843 = vweird.f32 %v836
    %vm844 = vmor %vm842, %vm843
    %v845 = vsel %vm844, %v836, %v841
    %v846 = vrsqrt.pop %v820
    %v847 = vmul.f32 %v846, %v820
    %v848 = vmul.f32 %v847, %v846
    %v849 = vmul.f32 0.5, %v848
    %v850 = vsub.f32 1.5, %v849
    %v851 = vmul.f32 %v846, %v850
    %vm852 = vweird.f32 %v820
    %vm853 = vweird.f32 %v846
    %vm854 = vmor %vm852, %vm853
    %v855 = vsel %vm854, %v846, %v851
    %v856 = vrsqrt.pop %v821
    %v857 = vmul.f32 %v856, %v821
    %v858 = vmul.f32 %v857, %v856
    %v859 = vmul.f32 0.5, %v858
    %v860 = vsub.f32 1.5, %v859
    %v861 = vmul.f32 %v856, %v860
    %vm862 = vweird.f32 %v821
    %vm863 = vweird.f32 %v856
    %vm864 = vmor %vm862, %vm863
    %v865 = vsel %vm864, %v856, %v861
    %v866 = vrsqrt.pop %v822
    %v867 = vmul.f32 %v866, %v822
    %v868 = vmul.f32 %v867, %v866
    %v869 = vmul.f32 0.5, %v868
    %v870 = vsub.f32 1.5, %v869
    %v871 = vmul.f32 %v866, %v870
    %vm872 = vweird.f32 %v822
    %vm873 = vweird.f32 %v866
    %vm874 = vmor %vm872, %vm873
    %v875 = vsel %vm874, %v866, %v871
    %v876 = vrsqrt.pop %v823
    %v877 = vmul.f32 %v876, %v823
    %v878 = vmul.f32 %v877, %v876
    %v879 = vmul.f32 0.5, %v878
    %v880 = vsub.f32 1.5, %v879
    %v881 = vmul.f32 %v876, %v880
    %vm882 = vweird.f32 %v823
    %vm883 = vweird.f32 %v876
    %vm884 = vmor %vm882, %vm883
    %v885 = vsel %vm884, %v876, %v881
    %v886 = vrsqrt.pop %v824
    %v887 = vmul.f32 %v886, %v824
    %v888 = vmul.f32 %v887, %v886
    %v889 = vmul.f32 0.5, %v888
    %v890 = vsub.f32 1.5, %v889
    %v891 = vmul.f32 %v886, %v890
    %vm892 = vweird.f32 %v824
    %vm893 = vweird.f32 %v886
    %vm894 = vmor %vm892, %vm893
    %v895 = vsel %vm894, %v886, %v891
    %v896 = vrsqrt.pop %v825
    %v897 = vmul.f32 %v896, %v825
    %v898 = vmul.f32 %v897, %v896
    %v899 = vmul.f32 0.5, %v898
    %v900 = vsub.f32 1.5, %v899
    %v901 = vmul.f32 %v896, %v900
    %vm902 = vweird.f32 %v825
    %vm903 = vweird.f32 %v896
    %vm904 = vmor %vm902, %vm903
    %v905 = vsel %vm904, %v896, %v901
    %v906 = vmul.f32 %v282, %v835
    %v907 = vmul.f32 %v283, %v835
    %v908 = vmul.f32 %v284, %v845
    %v909 = vmul.f32 %v285, %v845
    %v910 = vmul.f32 %v286, %v855
    %v911 = vmul.f32 %v287, %v855
    %v912 = vmul.f32 %v288, %v865
    %v913 = vmul.f32 %v289, %v865
    %v914 = vmul.f32 %v290, %v875
    %v915 = vmul.f32 %v291, %v875
    %v916 = vmul.f32 %v292, %v885
    %v917 = vmul.f32 %v293, %v885
    %v918 = vmul.f32 %v294, %v895
    %v919 = vmul.f32 %v295, %v895
    %v920 = vmul.f32 %v296, %v905
    %v921 = vmul.f32 %v297, %v905
    %922 = vmatpush.xpose.msra.mxu0 0.0
    %923 = vmatpush.xpose.msra.mxu0 0.0
    %924 = vmatpush.xpose.msra.mxu0 0.0
    %925 = vmatpush.xpose.msra.mxu0 0.0
    %926 = vmatpush.xpose.msra.mxu0 0.0
    %927 = vmatpush.xpose.msra.mxu0 0.0
    %928 = vmatpush.xpose.msra.mxu0 0.0
    %929 = vmatpush.xpose.msra.mxu0 0.0
    %930 = vmatpush.xpose.msra.mxu0 %v920
    %931 = vmatpush.xpose.msra.mxu0 %v918
    %932 = vmatpush.xpose.msra.mxu0 %v916
    %933 = vmatpush.xpose.msra.mxu0 %v914
    %934 = vmatpush.xpose.msra.mxu0 %v912
    %935 = vmatpush.xpose.msra.mxu0 %v910
    %936 = vmatpush.xpose.msra.mxu0 %v908
    %937 = vmatpush.xpose.msra.mxu0 %v906
    %938 = vmatmul.f32.gmra.mxu0 %v762
    %v939 = vpop.f32.mrf.mxu0
    %v940 = vadd.f32 %v58, %v939
    %941 = vmatmul.f32.gmra.mxu0 %v764
    %v942 = vpop.f32.mrf.mxu0
    %v943 = vadd.f32 %v59, %v942
    %944 = vmatmul.f32.gmra.mxu0 %v766
    %v945 = vpop.f32.mrf.mxu0
    %v946 = vadd.f32 %v60, %v945
    %947 = vmatmul.f32.gmra.mxu0 %v768
    %v948 = vpop.f32.mrf.mxu0
    %v949 = vadd.f32 %v61, %v948
    %950 = vmatmul.f32.gmra.mxu0 %v770
    %v951 = vpop.f32.mrf.mxu0
    %v952 = vadd.f32 %v62, %v951
    %953 = vmatmul.f32.gmra.mxu0 %v772
    %v954 = vpop.f32.mrf.mxu0
    %v955 = vadd.f32 %v63, %v954
    %956 = vmatmul.f32.gmra.mxu0 %v774
    %v957 = vpop.f32.mrf.mxu0
    %v958 = vadd.f32 %v64, %v957
    %959 = vmatmul.f32.gmra.mxu0 %v776
    %v960 = vpop.f32.mrf.mxu0
    %v961 = vadd.f32 %v65, %v960
    %962 = vdwg.mxu0
    %963 = vmatpush.xpose.msra.mxu0 0.0
    %964 = vmatpush.xpose.msra.mxu0 0.0
    %965 = vmatpush.xpose.msra.mxu0 0.0
    %966 = vmatpush.xpose.msra.mxu0 0.0
    %967 = vmatpush.xpose.msra.mxu0 0.0
    %968 = vmatpush.xpose.msra.mxu0 0.0
    %969 = vmatpush.xpose.msra.mxu0 0.0
    %970 = vmatpush.xpose.msra.mxu0 0.0
    %971 = vmatpush.xpose.msra.mxu0 %v921
    %972 = vmatpush.xpose.msra.mxu0 %v919
    %973 = vmatpush.xpose.msra.mxu0 %v917
    %974 = vmatpush.xpose.msra.mxu0 %v915
    %975 = vmatpush.xpose.msra.mxu0 %v913
    %976 = vmatpush.xpose.msra.mxu0 %v911
    %977 = vmatpush.xpose.msra.mxu0 %v909
    %978 = vmatpush.xpose.msra.mxu0 %v907
    %979 = vmatmul.f32.gmra.mxu0 %v763
    %v980 = vpop.f32.mrf.mxu0
    %v981 = vadd.f32 %v940, %v980
    %982 = vmatmul.f32.gmra.mxu0 %v765
    %v983 = vpop.f32.mrf.mxu0
    %v984 = vadd.f32 %v943, %v983
    %985 = vmatmul.f32.gmra.mxu0 %v767
    %v986 = vpop.f32.mrf.mxu0
    %v987 = vadd.f32 %v946, %v986
    %988 = vmatmul.f32.gmra.mxu0 %v769
    %v989 = vpop.f32.mrf.mxu0
    %v990 = vadd.f32 %v949, %v989
    %991 = vmatmul.f32.gmra.mxu0 %v771
    %v992 = vpop.f32.mrf.mxu0
    %v993 = vadd.f32 %v952, %v992
    %994 = vmatmul.f32.gmra.mxu0 %v773
    %v995 = vpop.f32.mrf.mxu0
    %v996 = vadd.f32 %v955, %v995
    %997 = vmatmul.f32.gmra.mxu0 %v775
    %v998 = vpop.f32.mrf.mxu0
    %v999 = vadd.f32 %v958, %v998
    %1000 = vmatmul.f32.gmra.mxu0 %v777
    %v1001 = vpop.f32.mrf.mxu0
    %v1002 = vadd.f32 %v961, %v1001
    %1003 = vdwg.mxu0
    %vm1004 = vcmask 523264
    %v1005 = vsel %vm1004, %v981, -inf
    %1006 = vmax.xlane.f32.xlu0 %v1005
    %v1007 = vpop.xlane.xlu0 %1006
    %v1008 = vsel %vm1004, %v984, -inf
    %1009 = vmax.xlane.f32.xlu0 %v1008
    %v1010 = vpop.xlane.xlu0 %1009
    %v1011 = vsel %vm1004, %v987, -inf
    %1012 = vmax.xlane.f32.xlu0 %v1011
    %v1013 = vpop.xlane.xlu0 %1012
    %v1014 = vsel %vm1004, %v990, -inf
    %1015 = vmax.xlane.f32.xlu0 %v1014
    %v1016 = vpop.xlane.xlu0 %1015
    %v1017 = vsel %vm1004, %v993, -inf
    %1018 = vmax.xlane.f32.xlu0 %v1017
    %v1019 = vpop.xlane.xlu0 %1018
    %v1020 = vsel %vm1004, %v996, -inf
    %1021 = vmax.xlane.f32.xlu0 %v1020
    %v1022 = vpop.xlane.xlu0 %1021
    %v1023 = vsel %vm1004, %v999, -inf
    %1024 = vmax.xlane.f32.xlu0 %v1023
    %v1025 = vpop.xlane.xlu0 %1024
    %v1026 = vsel %vm1004, %v1002, -inf
    %1027 = vmax.xlane.f32.xlu0 %v1026
    %v1028 = vpop.xlane.xlu0 %1027
    %v1029 = vsub.f32 %v981, %v1007
    %v1030 = vsub.f32 %v984, %v1010
    %v1031 = vsub.f32 %v987, %v1013
    %v1032 = vsub.f32 %v990, %v1016
    %v1033 = vsub.f32 %v993, %v1019
    %v1034 = vsub.f32 %v996, %v1022
    %v1035 = vsub.f32 %v999, %v1025
    %v1036 = vsub.f32 %v1002, %v1028
    %v1037 = vmul.f32 %v1029, 1.442695
    %v1038 = vpow.pop %v1037
    %v1039 = vmul.f32 %v1030, 1.442695
    %v1040 = vpow.pop %v1039
    %v1041 = vmul.f32 %v1031, 1.442695
    %v1042 = vpow.pop %v1041
    %v1043 = vmul.f32 %v1032, 1.442695
    %v1044 = vpow.pop %v1043
    %v1045 = vmul.f32 %v1033, 1.442695
    %v1046 = vpow.pop %v1045
    %v1047 = vmul.f32 %v1034, 1.442695
    %v1048 = vpow.pop %v1047
    %v1049 = vmul.f32 %v1035, 1.442695
    %v1050 = vpow.pop %v1049
    %v1051 = vmul.f32 %v1036, 1.442695
    %v1052 = vpow.pop %v1051
    %v1053 = vsel %vm1004, %v1038, 0.0
    %1054 = vadd.xlane.f32.xlu0 %v1053
    %v1055 = vpop.xlane.xlu0 %1054
    %v1056 = vsel %vm1004, %v1040, 0.0
    %1057 = vadd.xlane.f32.xlu0 %v1056
    %v1058 = vpop.xlane.xlu0 %1057
    %v1059 = vsel %vm1004, %v1042, 0.0
    %1060 = vadd.xlane.f32.xlu0 %v1059
    %v1061 = vpop.xlane.xlu0 %1060
    %v1062 = vsel %vm1004, %v1044, 0.0
    %1063 = vadd.xlane.f32.xlu0 %v1062
    %v1064 = vpop.xlane.xlu0 %1063
    %v1065 = vsel %vm1004, %v1046, 0.0
    %1066 = vadd.xlane.f32.xlu0 %v1065
    %v1067 = vpop.xlane.xlu0 %1066
    %v1068 = vsel %vm1004, %v1048, 0.0
    %1069 = vadd.xlane.f32.xlu0 %v1068
    %v1070 = vpop.xlane.xlu0 %1069
    %v1071 = vsel %vm1004, %v1050, 0.0
    %1072 = vadd.xlane.f32.xlu0 %v1071
    %v1073 = vpop.xlane.xlu0 %1072
    %v1074 = vsel %vm1004, %v1052, 0.0
    %1075 = vadd.xlane.f32.xlu0 %v1074
    %v1076 = vpop.xlane.xlu0 %1075
    %v1077 = vrcp.pop %v1055
    %v1078 = vrcp.pop %v1058
    %v1079 = vrcp.pop %v1061
    %v1080 = vrcp.pop %v1064
    %v1081 = vrcp.pop %v1067
    %v1082 = vrcp.pop %v1070
    %v1083 = vrcp.pop %v1073
    %v1084 = vrcp.pop %v1076
    %v1085 = vmul.f32 %v1055, %v1077
    %v1086 = vmul.f32 %v1058, %v1078
    %v1087 = vmul.f32 %v1061, %v1079
    %v1088 = vmul.f32 %v1064, %v1080
    %v1089 = vmul.f32 %v1067, %v1081
    %v1090 = vmul.f32 %v1070, %v1082
    %v1091 = vmul.f32 %v1073, %v1083
    %v1092 = vmul.f32 %v1076, %v1084
    %v1093 = vsub.f32 2.0, %v1085
    %v1094 = vsub.f32 2.0, %v1086
    %v1095 = vsub.f32 2.0, %v1087
    %v1096 = vsub.f32 2.0, %v1088
    %v1097 = vsub.f32 2.0, %v1089
    %v1098 = vsub.f32 2.0, %v1090
    %v1099 = vsub.f32 2.0, %v1091
    %v1100 = vsub.f32 2.0, %v1092
    %v1101 = vmul.f32 %v1077, %v1093
    %v1102 = vmul.f32 %v1078, %v1094
    %v1103 = vmul.f32 %v1079, %v1095
    %v1104 = vmul.f32 %v1080, %v1096
    %v1105 = vmul.f32 %v1081, %v1097
    %v1106 = vmul.f32 %v1082, %v1098
    %v1107 = vmul.f32 %v1083, %v1099
    %v1108 = vmul.f32 %v1084, %v1100
    %v1109 = vmul.f32 %v1038, %v1101
    %v1110 = vmul.f32 %v1040, %v1102
    %v1111 = vmul.f32 %v1042, %v1103
    %v1112 = vmul.f32 %v1044, %v1104
    %v1113 = vmul.f32 %v1046, %v1105
    %v1114 = vmul.f32 %v1048, %v1106
    %v1115 = vmul.f32 %v1050, %v1107
    %v1116 = vmul.f32 %v1052, %v1108
    %v1118 = vsel %vm1004, %v1109, 0
    %v1121 = vsel %vm1004, %v1110, 0
    %v1124 = vsel %vm1004, %v1111, 0
    %v1127 = vsel %vm1004, %v1112, 0
    %v1130 = vsel %vm1004, %v1113, 0
    %v1133 = vsel %vm1004, %v1114, 0
    %v1136 = vsel %vm1004, %v1115, 0
    %v1139 = vsel %vm1004, %v1116, 0
    %1141 = vmatpush.msra.mxu0 0.0
    %1142 = vmatpush.msra.mxu0 0.0
    %1143 = vmatpush.msra.mxu0 0.0
    %1144 = vmatpush.msra.mxu0 0.0
    %1145 = vmatpush.msra.mxu0 0.0
    %1146 = vmatpush.msra.mxu0 0.0
    %1147 = vmatpush.msra.mxu0 0.0
    %1148 = vmatpush.msra.mxu0 0.0
    %1149 = vmatpush.msra.mxu0 %v392
    %1150 = vmatpush.msra.mxu0 %v390
    %1151 = vmatpush.msra.mxu0 %v388
    %1152 = vmatpush.msra.mxu0 %v386
    %1153 = vmatpush.msra.mxu0 %v384
    %1154 = vmatpush.msra.mxu0 %v382
    %1155 = vmatpush.msra.mxu0 %v380
    %1156 = vmatpush.msra.mxu0 %v378
    %1157 = vmatmul.f32.gmra.mxu0 %v1118
    %v1158 = vpop.f32.mrf.mxu0
    %v1159 = vadd.f32 0.0, %v1158
    %1160 = vmatmul.f32.gmra.mxu0 %v1121
    %v1161 = vpop.f32.mrf.mxu0
    %v1162 = vadd.f32 0.0, %v1161
    %1163 = vmatmul.f32.gmra.mxu0 %v1124
    %v1164 = vpop.f32.mrf.mxu0
    %v1165 = vadd.f32 0.0, %v1164
    %1166 = vmatmul.f32.gmra.mxu0 %v1127
    %v1167 = vpop.f32.mrf.mxu0
    %v1168 = vadd.f32 0.0, %v1167
    %1169 = vmatmul.f32.gmra.mxu0 %v1130
    %v1170 = vpop.f32.mrf.mxu0
    %v1171 = vadd.f32 0.0, %v1170
    %1172 = vmatmul.f32.gmra.mxu0 %v1133
    %v1173 = vpop.f32.mrf.mxu0
    %v1174 = vadd.f32 0.0, %v1173
    %1175 = vmatmul.f32.gmra.mxu0 %v1136
    %v1176 = vpop.f32.mrf.mxu0
    %v1177 = vadd.f32 0.0, %v1176
    %1178 = vmatmul.f32.gmra.mxu0 %v1139
    %v1179 = vpop.f32.mrf.mxu0
    %v1180 = vadd.f32 0.0, %v1179
    %1181 = vdwg.mxu0
    %1182 = vmatpush.msra.mxu0 0.0
    %1183 = vmatpush.msra.mxu0 0.0
    %1184 = vmatpush.msra.mxu0 0.0
    %1185 = vmatpush.msra.mxu0 0.0
    %1186 = vmatpush.msra.mxu0 0.0
    %1187 = vmatpush.msra.mxu0 0.0
    %1188 = vmatpush.msra.mxu0 0.0
    %1189 = vmatpush.msra.mxu0 0.0
    %1190 = vmatpush.msra.mxu0 %v393
    %1191 = vmatpush.msra.mxu0 %v391
    %1192 = vmatpush.msra.mxu0 %v389
    %1193 = vmatpush.msra.mxu0 %v387
    %1194 = vmatpush.msra.mxu0 %v385
    %1195 = vmatpush.msra.mxu0 %v383
    %1196 = vmatpush.msra.mxu0 %v381
    %1197 = vmatpush.msra.mxu0 %v379
    %1198 = vmatmul.f32.gmra.mxu0 %v1118
    %v1199 = vpop.f32.mrf.mxu0
    %v1200 = vadd.f32 0.0, %v1199
    %1201 = vmatmul.f32.gmra.mxu0 %v1121
    %v1202 = vpop.f32.mrf.mxu0
    %v1203 = vadd.f32 0.0, %v1202
    %1204 = vmatmul.f32.gmra.mxu0 %v1124
    %v1205 = vpop.f32.mrf.mxu0
    %v1206 = vadd.f32 0.0, %v1205
    %1207 = vmatmul.f32.gmra.mxu0 %v1127
    %v1208 = vpop.f32.mrf.mxu0
    %v1209 = vadd.f32 0.0, %v1208
    %1210 = vmatmul.f32.gmra.mxu0 %v1130
    %v1211 = vpop.f32.mrf.mxu0
    %v1212 = vadd.f32 0.0, %v1211
    %1213 = vmatmul.f32.gmra.mxu0 %v1133
    %v1214 = vpop.f32.mrf.mxu0
    %v1215 = vadd.f32 0.0, %v1214
    %1216 = vmatmul.f32.gmra.mxu0 %v1136
    %v1217 = vpop.f32.mrf.mxu0
    %v1218 = vadd.f32 0.0, %v1217
    %1219 = vmatmul.f32.gmra.mxu0 %v1139
    %v1220 = vpop.f32.mrf.mxu0
    %v1221 = vadd.f32 0.0, %v1220
    %1222 = vdwg.mxu0
    %v1223 = vmul.f32 %v1159, %v1159
    %v1224 = vmul.f32 %v1200, %v1200
    %v1225 = vmul.f32 %v1162, %v1162
    %v1226 = vmul.f32 %v1203, %v1203
    %v1227 = vmul.f32 %v1165, %v1165
    %v1228 = vmul.f32 %v1206, %v1206
    %v1229 = vmul.f32 %v1168, %v1168
    %v1230 = vmul.f32 %v1209, %v1209
    %v1231 = vmul.f32 %v1171, %v1171
    %v1232 = vmul.f32 %v1212, %v1212
    %v1233 = vmul.f32 %v1174, %v1174
    %v1234 = vmul.f32 %v1215, %v1215
    %v1235 = vmul.f32 %v1177, %v1177
    %v1236 = vmul.f32 %v1218, %v1218
    %v1237 = vmul.f32 %v1180, %v1180
    %v1238 = vmul.f32 %v1221, %v1221
    %v1239 = vadd.f32 %v1223, %v1224
    %1240 = vadd.xlane.f32.xlu0 %v1239
    %v1241 = vpop.xlane.xlu0 %1240
    %v1242 = vadd.f32 %v1225, %v1226
    %1243 = vadd.xlane.f32.xlu0 %v1242
    %v1244 = vpop.xlane.xlu0 %1243
    %v1245 = vadd.f32 %v1227, %v1228
    %1246 = vadd.xlane.f32.xlu0 %v1245
    %v1247 = vpop.xlane.xlu0 %1246
    %v1248 = vadd.f32 %v1229, %v1230
    %1249 = vadd.xlane.f32.xlu0 %v1248
    %v1250 = vpop.xlane.xlu0 %1249
    %v1251 = vadd.f32 %v1231, %v1232
    %1252 = vadd.xlane.f32.xlu0 %v1251
    %v1253 = vpop.xlane.xlu0 %1252
    %v1254 = vadd.f32 %v1233, %v1234
    %1255 = vadd.xlane.f32.xlu0 %v1254
    %v1256 = vpop.xlane.xlu0 %1255
    %v1257 = vadd.f32 %v1235, %v1236
    %1258 = vadd.xlane.f32.xlu0 %v1257
    %v1259 = vpop.xlane.xlu0 %1258
    %v1260 = vadd.f32 %v1237, %v1238
    %1261 = vadd.xlane.f32.xlu0 %v1260
    %v1262 = vpop.xlane.xlu0 %1261
    %v1263 = vmax.f32 %v1241, 1e-24
    %v1264 = vmax.f32 %v1244, 1e-24
    %v1265 = vmax.f32 %v1247, 1e-24
    %v1266 = vmax.f32 %v1250, 1e-24
    %v1267 = vmax.f32 %v1253, 1e-24
    %v1268 = vmax.f32 %v1256, 1e-24
    %v1269 = vmax.f32 %v1259, 1e-24
    %v1270 = vmax.f32 %v1262, 1e-24
    %v1271 = vrsqrt.pop %v1263
    %v1272 = vmul.f32 %v1271, %v1263
    %v1273 = vmul.f32 %v1272, %v1271
    %v1274 = vmul.f32 0.5, %v1273
    %v1275 = vsub.f32 1.5, %v1274
    %v1276 = vmul.f32 %v1271, %v1275
    %vm1277 = vweird.f32 %v1263
    %vm1278 = vweird.f32 %v1271
    %vm1279 = vmor %vm1277, %vm1278
    %v1280 = vsel %vm1279, %v1271, %v1276
    %v1281 = vrsqrt.pop %v1264
    %v1282 = vmul.f32 %v1281, %v1264
    %v1283 = vmul.f32 %v1282, %v1281
    %v1284 = vmul.f32 0.5, %v1283
    %v1285 = vsub.f32 1.5, %v1284
    %v1286 = vmul.f32 %v1281, %v1285
    %vm1287 = vweird.f32 %v1264
    %vm1288 = vweird.f32 %v1281
    %vm1289 = vmor %vm1287, %vm1288
    %v1290 = vsel %vm1289, %v1281, %v1286
    %v1291 = vrsqrt.pop %v1265
    %v1292 = vmul.f32 %v1291, %v1265
    %v1293 = vmul.f32 %v1292, %v1291
    %v1294 = vmul.f32 0.5, %v1293
    %v1295 = vsub.f32 1.5, %v1294
    %v1296 = vmul.f32 %v1291, %v1295
    %vm1297 = vweird.f32 %v1265
    %vm1298 = vweird.f32 %v1291
    %vm1299 = vmor %vm1297, %vm1298
    %v1300 = vsel %vm1299, %v1291, %v1296
    %v1301 = vrsqrt.pop %v1266
    %v1302 = vmul.f32 %v1301, %v1266
    %v1303 = vmul.f32 %v1302, %v1301
    %v1304 = vmul.f32 0.5, %v1303
    %v1305 = vsub.f32 1.5, %v1304
    %v1306 = vmul.f32 %v1301, %v1305
    %vm1307 = vweird.f32 %v1266
    %vm1308 = vweird.f32 %v1301
    %vm1309 = vmor %vm1307, %vm1308
    %v1310 = vsel %vm1309, %v1301, %v1306
    %v1311 = vrsqrt.pop %v1267
    %v1312 = vmul.f32 %v1311, %v1267
    %v1313 = vmul.f32 %v1312, %v1311
    %v1314 = vmul.f32 0.5, %v1313
    %v1315 = vsub.f32 1.5, %v1314
    %v1316 = vmul.f32 %v1311, %v1315
    %vm1317 = vweird.f32 %v1267
    %vm1318 = vweird.f32 %v1311
    %vm1319 = vmor %vm1317, %vm1318
    %v1320 = vsel %vm1319, %v1311, %v1316
    %v1321 = vrsqrt.pop %v1268
    %v1322 = vmul.f32 %v1321, %v1268
    %v1323 = vmul.f32 %v1322, %v1321
    %v1324 = vmul.f32 0.5, %v1323
    %v1325 = vsub.f32 1.5, %v1324
    %v1326 = vmul.f32 %v1321, %v1325
    %vm1327 = vweird.f32 %v1268
    %vm1328 = vweird.f32 %v1321
    %vm1329 = vmor %vm1327, %vm1328
    %v1330 = vsel %vm1329, %v1321, %v1326
    %v1331 = vrsqrt.pop %v1269
    %v1332 = vmul.f32 %v1331, %v1269
    %v1333 = vmul.f32 %v1332, %v1331
    %v1334 = vmul.f32 0.5, %v1333
    %v1335 = vsub.f32 1.5, %v1334
    %v1336 = vmul.f32 %v1331, %v1335
    %vm1337 = vweird.f32 %v1269
    %vm1338 = vweird.f32 %v1331
    %vm1339 = vmor %vm1337, %vm1338
    %v1340 = vsel %vm1339, %v1331, %v1336
    %v1341 = vrsqrt.pop %v1270
    %v1342 = vmul.f32 %v1341, %v1270
    %v1343 = vmul.f32 %v1342, %v1341
    %v1344 = vmul.f32 0.5, %v1343
    %v1345 = vsub.f32 1.5, %v1344
    %v1346 = vmul.f32 %v1341, %v1345
    %vm1347 = vweird.f32 %v1270
    %vm1348 = vweird.f32 %v1341
    %vm1349 = vmor %vm1347, %vm1348
    %v1350 = vsel %vm1349, %v1341, %v1346
    %v1351 = vmul.f32 %v1159, %v1280
    %v1352 = vmul.f32 %v1200, %v1280
    %v1353 = vmul.f32 %v1162, %v1290
    %v1354 = vmul.f32 %v1203, %v1290
    %v1355 = vmul.f32 %v1165, %v1300
    %v1356 = vmul.f32 %v1206, %v1300
    %v1357 = vmul.f32 %v1168, %v1310
    %v1358 = vmul.f32 %v1209, %v1310
    %v1359 = vmul.f32 %v1171, %v1320
    %v1360 = vmul.f32 %v1212, %v1320
    %v1361 = vmul.f32 %v1174, %v1330
    %v1362 = vmul.f32 %v1215, %v1330
    %v1363 = vmul.f32 %v1177, %v1340
    %v1364 = vmul.f32 %v1218, %v1340
    %v1365 = vmul.f32 %v1180, %v1350
    %v1366 = vmul.f32 %v1221, %v1350
    %1367 = vset.pattern.permute.xlu0 13
    %1368 = vperm.xlu0 %1367, %v50
    %v1369 = vpop.permute.xlu0 %1368
    %1371 = vset.pattern.permute.xlu0 13
    %1372 = vperm.xlu0 %1371, %v51
    %v1373 = vpop.permute.xlu0 %1372
    %1375 = vset.pattern.permute.xlu0 13
    %1376 = vperm.xlu0 %1375, %v52
    %v1377 = vpop.permute.xlu0 %1376
    %1379 = vset.pattern.permute.xlu0 13
    %1380 = vperm.xlu0 %1379, %v53
    %v1381 = vpop.permute.xlu0 %1380
    %1383 = vset.pattern.permute.xlu0 13
    %1384 = vperm.xlu0 %1383, %v54
    %v1385 = vpop.permute.xlu0 %1384
    %1387 = vset.pattern.permute.xlu0 13
    %1388 = vperm.xlu0 %1387, %v55
    %v1389 = vpop.permute.xlu0 %1388
    %1391 = vset.pattern.permute.xlu0 13
    %1392 = vperm.xlu0 %1391, %v56
    %v1393 = vpop.permute.xlu0 %1392
    %1395 = vset.pattern.permute.xlu0 13
    %1396 = vperm.xlu0 %1395, %v57
    %v1397 = vpop.permute.xlu0 %1396
    %v1399 = vmul.f32 %v1351, %v1369
    %v1400 = vmul.f32 %v1352, %v1369
    %v1401 = vmul.f32 %v1353, %v1373
    %v1402 = vmul.f32 %v1354, %v1373
    %v1403 = vmul.f32 %v1355, %v1377
    %v1404 = vmul.f32 %v1356, %v1377
    %v1405 = vmul.f32 %v1357, %v1381
    %v1406 = vmul.f32 %v1358, %v1381
    %v1407 = vmul.f32 %v1359, %v1385
    %v1408 = vmul.f32 %v1360, %v1385
    %v1409 = vmul.f32 %v1361, %v1389
    %v1410 = vmul.f32 %v1362, %v1389
    %v1411 = vmul.f32 %v1363, %v1393
    %v1412 = vmul.f32 %v1364, %v1393
    %v1413 = vmul.f32 %v1365, %v1397
    %v1414 = vmul.f32 %v1366, %v1397
    %v1415 = vmul.f32 %v474, %v474
    %v1416 = vmul.f32 %v475, %v475
    %v1417 = vmul.f32 %v476, %v476
    %v1418 = vmul.f32 %v477, %v477
    %v1419 = vmul.f32 %v478, %v478
    %v1420 = vmul.f32 %v479, %v479
    %v1421 = vmul.f32 %v480, %v480
    %v1422 = vmul.f32 %v481, %v481
    %v1423 = vmul.f32 %v482, %v482
    %v1424 = vmul.f32 %v483, %v483
    %v1425 = vmul.f32 %v484, %v484
    %v1426 = vmul.f32 %v485, %v485
    %v1427 = vmul.f32 %v486, %v486
    %v1428 = vmul.f32 %v487, %v487
    %v1429 = vmul.f32 %v488, %v488
    %v1430 = vmul.f32 %v489, %v489
    %v1431 = vadd.f32 %v1415, %v1416
    %1432 = vadd.xlane.f32.xlu0 %v1431
    %v1433 = vpop.xlane.xlu0 %1432
    %v1434 = vadd.f32 %v1417, %v1418
    %1435 = vadd.xlane.f32.xlu0 %v1434
    %v1436 = vpop.xlane.xlu0 %1435
    %v1437 = vadd.f32 %v1419, %v1420
    %1438 = vadd.xlane.f32.xlu0 %v1437
    %v1439 = vpop.xlane.xlu0 %1438
    %v1440 = vadd.f32 %v1421, %v1422
    %1441 = vadd.xlane.f32.xlu0 %v1440
    %v1442 = vpop.xlane.xlu0 %1441
    %v1443 = vadd.f32 %v1423, %v1424
    %1444 = vadd.xlane.f32.xlu0 %v1443
    %v1445 = vpop.xlane.xlu0 %1444
    %v1446 = vadd.f32 %v1425, %v1426
    %1447 = vadd.xlane.f32.xlu0 %v1446
    %v1448 = vpop.xlane.xlu0 %1447
    %v1449 = vadd.f32 %v1427, %v1428
    %1450 = vadd.xlane.f32.xlu0 %v1449
    %v1451 = vpop.xlane.xlu0 %1450
    %v1452 = vadd.f32 %v1429, %v1430
    %1453 = vadd.xlane.f32.xlu0 %v1452
    %v1454 = vpop.xlane.xlu0 %1453
    %v1455 = vmax.f32 %v1433, 1e-24
    %v1456 = vmax.f32 %v1436, 1e-24
    %v1457 = vmax.f32 %v1439, 1e-24
    %v1458 = vmax.f32 %v1442, 1e-24
    %v1459 = vmax.f32 %v1445, 1e-24
    %v1460 = vmax.f32 %v1448, 1e-24
    %v1461 = vmax.f32 %v1451, 1e-24
    %v1462 = vmax.f32 %v1454, 1e-24
    %v1463 = vrsqrt.pop %v1455
    %v1464 = vmul.f32 %v1463, %v1455
    %v1465 = vmul.f32 %v1464, %v1463
    %v1466 = vmul.f32 0.5, %v1465
    %v1467 = vsub.f32 1.5, %v1466
    %v1468 = vmul.f32 %v1463, %v1467
    %vm1469 = vweird.f32 %v1455
    %vm1470 = vweird.f32 %v1463
    %vm1471 = vmor %vm1469, %vm1470
    %v1472 = vsel %vm1471, %v1463, %v1468
    %v1473 = vrsqrt.pop %v1456
    %v1474 = vmul.f32 %v1473, %v1456
    %v1475 = vmul.f32 %v1474, %v1473
    %v1476 = vmul.f32 0.5, %v1475
    %v1477 = vsub.f32 1.5, %v1476
    %v1478 = vmul.f32 %v1473, %v1477
    %vm1479 = vweird.f32 %v1456
    %vm1480 = vweird.f32 %v1473
    %vm1481 = vmor %vm1479, %vm1480
    %v1482 = vsel %vm1481, %v1473, %v1478
    %v1483 = vrsqrt.pop %v1457
    %v1484 = vmul.f32 %v1483, %v1457
    %v1485 = vmul.f32 %v1484, %v1483
    %v1486 = vmul.f32 0.5, %v1485
    %v1487 = vsub.f32 1.5, %v1486
    %v1488 = vmul.f32 %v1483, %v1487
    %vm1489 = vweird.f32 %v1457
    %vm1490 = vweird.f32 %v1483
    %vm1491 = vmor %vm1489, %vm1490
    %v1492 = vsel %vm1491, %v1483, %v1488
    %v1493 = vrsqrt.pop %v1458
    %v1494 = vmul.f32 %v1493, %v1458
    %v1495 = vmul.f32 %v1494, %v1493
    %v1496 = vmul.f32 0.5, %v1495
    %v1497 = vsub.f32 1.5, %v1496
    %v1498 = vmul.f32 %v1493, %v1497
    %vm1499 = vweird.f32 %v1458
    %vm1500 = vweird.f32 %v1493
    %vm1501 = vmor %vm1499, %vm1500
    %v1502 = vsel %vm1501, %v1493, %v1498
    %v1503 = vrsqrt.pop %v1459
    %v1504 = vmul.f32 %v1503, %v1459
    %v1505 = vmul.f32 %v1504, %v1503
    %v1506 = vmul.f32 0.5, %v1505
    %v1507 = vsub.f32 1.5, %v1506
    %v1508 = vmul.f32 %v1503, %v1507
    %vm1509 = vweird.f32 %v1459
    %vm1510 = vweird.f32 %v1503
    %vm1511 = vmor %vm1509, %vm1510
    %v1512 = vsel %vm1511, %v1503, %v1508
    %v1513 = vrsqrt.pop %v1460
    %v1514 = vmul.f32 %v1513, %v1460
    %v1515 = vmul.f32 %v1514, %v1513
    %v1516 = vmul.f32 0.5, %v1515
    %v1517 = vsub.f32 1.5, %v1516
    %v1518 = vmul.f32 %v1513, %v1517
    %vm1519 = vweird.f32 %v1460
    %vm1520 = vweird.f32 %v1513
    %vm1521 = vmor %vm1519, %vm1520
    %v1522 = vsel %vm1521, %v1513, %v1518
    %v1523 = vrsqrt.pop %v1461
    %v1524 = vmul.f32 %v1523, %v1461
    %v1525 = vmul.f32 %v1524, %v1523
    %v1526 = vmul.f32 0.5, %v1525
    %v1527 = vsub.f32 1.5, %v1526
    %v1528 = vmul.f32 %v1523, %v1527
    %vm1529 = vweird.f32 %v1461
    %vm1530 = vweird.f32 %v1523
    %vm1531 = vmor %vm1529, %vm1530
    %v1532 = vsel %vm1531, %v1523, %v1528
    %v1533 = vrsqrt.pop %v1462
    %v1534 = vmul.f32 %v1533, %v1462
    %v1535 = vmul.f32 %v1534, %v1533
    %v1536 = vmul.f32 0.5, %v1535
    %v1537 = vsub.f32 1.5, %v1536
    %v1538 = vmul.f32 %v1533, %v1537
    %vm1539 = vweird.f32 %v1462
    %vm1540 = vweird.f32 %v1533
    %vm1541 = vmor %vm1539, %vm1540
    %v1542 = vsel %vm1541, %v1533, %v1538
    %v1543 = vmul.f32 %v474, %v1472
    %v1544 = vmul.f32 %v475, %v1472
    %v1545 = vmul.f32 %v476, %v1482
    %v1546 = vmul.f32 %v477, %v1482
    %v1547 = vmul.f32 %v478, %v1492
    %v1548 = vmul.f32 %v479, %v1492
    %v1549 = vmul.f32 %v480, %v1502
    %v1550 = vmul.f32 %v481, %v1502
    %v1551 = vmul.f32 %v482, %v1512
    %v1552 = vmul.f32 %v483, %v1512
    %v1553 = vmul.f32 %v484, %v1522
    %v1554 = vmul.f32 %v485, %v1522
    %v1555 = vmul.f32 %v486, %v1532
    %v1556 = vmul.f32 %v487, %v1532
    %v1557 = vmul.f32 %v488, %v1542
    %v1558 = vmul.f32 %v489, %v1542
    %1559 = vmatpush.xpose.msra.mxu0 0.0
    %1560 = vmatpush.xpose.msra.mxu0 0.0
    %1561 = vmatpush.xpose.msra.mxu0 0.0
    %1562 = vmatpush.xpose.msra.mxu0 0.0
    %1563 = vmatpush.xpose.msra.mxu0 0.0
    %1564 = vmatpush.xpose.msra.mxu0 0.0
    %1565 = vmatpush.xpose.msra.mxu0 0.0
    %1566 = vmatpush.xpose.msra.mxu0 0.0
    %1567 = vmatpush.xpose.msra.mxu0 %v1557
    %1568 = vmatpush.xpose.msra.mxu0 %v1555
    %1569 = vmatpush.xpose.msra.mxu0 %v1553
    %1570 = vmatpush.xpose.msra.mxu0 %v1551
    %1571 = vmatpush.xpose.msra.mxu0 %v1549
    %1572 = vmatpush.xpose.msra.mxu0 %v1547
    %1573 = vmatpush.xpose.msra.mxu0 %v1545
    %1574 = vmatpush.xpose.msra.mxu0 %v1543
    %1575 = vmatmul.f32.gmra.mxu0 %v1399
    %v1576 = vpop.f32.mrf.mxu0
    %v1577 = vadd.f32 %v58, %v1576
    %1578 = vmatmul.f32.gmra.mxu0 %v1401
    %v1579 = vpop.f32.mrf.mxu0
    %v1580 = vadd.f32 %v59, %v1579
    %1581 = vmatmul.f32.gmra.mxu0 %v1403
    %v1582 = vpop.f32.mrf.mxu0
    %v1583 = vadd.f32 %v60, %v1582
    %1584 = vmatmul.f32.gmra.mxu0 %v1405
    %v1585 = vpop.f32.mrf.mxu0
    %v1586 = vadd.f32 %v61, %v1585
    %1587 = vmatmul.f32.gmra.mxu0 %v1407
    %v1588 = vpop.f32.mrf.mxu0
    %v1589 = vadd.f32 %v62, %v1588
    %1590 = vmatmul.f32.gmra.mxu0 %v1409
    %v1591 = vpop.f32.mrf.mxu0
    %v1592 = vadd.f32 %v63, %v1591
    %1593 = vmatmul.f32.gmra.mxu0 %v1411
    %v1594 = vpop.f32.mrf.mxu0
    %v1595 = vadd.f32 %v64, %v1594
    %1596 = vmatmul.f32.gmra.mxu0 %v1413
    %v1597 = vpop.f32.mrf.mxu0
    %v1598 = vadd.f32 %v65, %v1597
    %1599 = vdwg.mxu0
    %1600 = vmatpush.xpose.msra.mxu0 0.0
    %1601 = vmatpush.xpose.msra.mxu0 0.0
    %1602 = vmatpush.xpose.msra.mxu0 0.0
    %1603 = vmatpush.xpose.msra.mxu0 0.0
    %1604 = vmatpush.xpose.msra.mxu0 0.0
    %1605 = vmatpush.xpose.msra.mxu0 0.0
    %1606 = vmatpush.xpose.msra.mxu0 0.0
    %1607 = vmatpush.xpose.msra.mxu0 0.0
    %1608 = vmatpush.xpose.msra.mxu0 %v1558
    %1609 = vmatpush.xpose.msra.mxu0 %v1556
    %1610 = vmatpush.xpose.msra.mxu0 %v1554
    %1611 = vmatpush.xpose.msra.mxu0 %v1552
    %1612 = vmatpush.xpose.msra.mxu0 %v1550
    %1613 = vmatpush.xpose.msra.mxu0 %v1548
    %1614 = vmatpush.xpose.msra.mxu0 %v1546
    %1615 = vmatpush.xpose.msra.mxu0 %v1544
    %1616 = vmatmul.f32.gmra.mxu0 %v1400
    %v1617 = vpop.f32.mrf.mxu0
    %v1618 = vadd.f32 %v1577, %v1617
    %1619 = vmatmul.f32.gmra.mxu0 %v1402
    %v1620 = vpop.f32.mrf.mxu0
    %v1621 = vadd.f32 %v1580, %v1620
    %1622 = vmatmul.f32.gmra.mxu0 %v1404
    %v1623 = vpop.f32.mrf.mxu0
    %v1624 = vadd.f32 %v1583, %v1623
    %1625 = vmatmul.f32.gmra.mxu0 %v1406
    %v1626 = vpop.f32.mrf.mxu0
    %v1627 = vadd.f32 %v1586, %v1626
    %1628 = vmatmul.f32.gmra.mxu0 %v1408
    %v1629 = vpop.f32.mrf.mxu0
    %v1630 = vadd.f32 %v1589, %v1629
    %1631 = vmatmul.f32.gmra.mxu0 %v1410
    %v1632 = vpop.f32.mrf.mxu0
    %v1633 = vadd.f32 %v1592, %v1632
    %1634 = vmatmul.f32.gmra.mxu0 %v1412
    %v1635 = vpop.f32.mrf.mxu0
    %v1636 = vadd.f32 %v1595, %v1635
    %1637 = vmatmul.f32.gmra.mxu0 %v1414
    %v1638 = vpop.f32.mrf.mxu0
    %v1639 = vadd.f32 %v1598, %v1638
    %1640 = vdwg.mxu0
    %v1641 = vsel %vm1004, %v1618, -inf
    %1642 = vmax.xlane.f32.xlu0 %v1641
    %v1643 = vpop.xlane.xlu0 %1642
    %v1644 = vsel %vm1004, %v1621, -inf
    %1645 = vmax.xlane.f32.xlu0 %v1644
    %v1646 = vpop.xlane.xlu0 %1645
    %v1647 = vsel %vm1004, %v1624, -inf
    %1648 = vmax.xlane.f32.xlu0 %v1647
    %v1649 = vpop.xlane.xlu0 %1648
    %v1650 = vsel %vm1004, %v1627, -inf
    %1651 = vmax.xlane.f32.xlu0 %v1650
    %v1652 = vpop.xlane.xlu0 %1651
    %v1653 = vsel %vm1004, %v1630, -inf
    %1654 = vmax.xlane.f32.xlu0 %v1653
    %v1655 = vpop.xlane.xlu0 %1654
    %v1656 = vsel %vm1004, %v1633, -inf
    %1657 = vmax.xlane.f32.xlu0 %v1656
    %v1658 = vpop.xlane.xlu0 %1657
    %v1659 = vsel %vm1004, %v1636, -inf
    %1660 = vmax.xlane.f32.xlu0 %v1659
    %v1661 = vpop.xlane.xlu0 %1660
    %v1662 = vsel %vm1004, %v1639, -inf
    %1663 = vmax.xlane.f32.xlu0 %v1662
    %v1664 = vpop.xlane.xlu0 %1663
    %v1665 = vsub.f32 %v1618, %v1643
    %v1666 = vsub.f32 %v1621, %v1646
    %v1667 = vsub.f32 %v1624, %v1649
    %v1668 = vsub.f32 %v1627, %v1652
    %v1669 = vsub.f32 %v1630, %v1655
    %v1670 = vsub.f32 %v1633, %v1658
    %v1671 = vsub.f32 %v1636, %v1661
    %v1672 = vsub.f32 %v1639, %v1664
    %v1673 = vmul.f32 %v1665, 1.442695
    %v1674 = vpow.pop %v1673
    %v1675 = vmul.f32 %v1666, 1.442695
    %v1676 = vpow.pop %v1675
    %v1677 = vmul.f32 %v1667, 1.442695
    %v1678 = vpow.pop %v1677
    %v1679 = vmul.f32 %v1668, 1.442695
    %v1680 = vpow.pop %v1679
    %v1681 = vmul.f32 %v1669, 1.442695
    %v1682 = vpow.pop %v1681
    %v1683 = vmul.f32 %v1670, 1.442695
    %v1684 = vpow.pop %v1683
    %v1685 = vmul.f32 %v1671, 1.442695
    %v1686 = vpow.pop %v1685
    %v1687 = vmul.f32 %v1672, 1.442695
    %v1688 = vpow.pop %v1687
    %v1689 = vsel %vm1004, %v1674, 0.0
    %1690 = vadd.xlane.f32.xlu0 %v1689
    %v1691 = vpop.xlane.xlu0 %1690
    %v1692 = vsel %vm1004, %v1676, 0.0
    %1693 = vadd.xlane.f32.xlu0 %v1692
    %v1694 = vpop.xlane.xlu0 %1693
    %v1695 = vsel %vm1004, %v1678, 0.0
    %1696 = vadd.xlane.f32.xlu0 %v1695
    %v1697 = vpop.xlane.xlu0 %1696
    %v1698 = vsel %vm1004, %v1680, 0.0
    %1699 = vadd.xlane.f32.xlu0 %v1698
    %v1700 = vpop.xlane.xlu0 %1699
    %v1701 = vsel %vm1004, %v1682, 0.0
    %1702 = vadd.xlane.f32.xlu0 %v1701
    %v1703 = vpop.xlane.xlu0 %1702
    %v1704 = vsel %vm1004, %v1684, 0.0
    %1705 = vadd.xlane.f32.xlu0 %v1704
    %v1706 = vpop.xlane.xlu0 %1705
    %v1707 = vsel %vm1004, %v1686, 0.0
    %1708 = vadd.xlane.f32.xlu0 %v1707
    %v1709 = vpop.xlane.xlu0 %1708
    %v1710 = vsel %vm1004, %v1688, 0.0
    %1711 = vadd.xlane.f32.xlu0 %v1710
    %v1712 = vpop.xlane.xlu0 %1711
    %v1713 = vrcp.pop %v1691
    %v1714 = vrcp.pop %v1694
    %v1715 = vrcp.pop %v1697
    %v1716 = vrcp.pop %v1700
    %v1717 = vrcp.pop %v1703
    %v1718 = vrcp.pop %v1706
    %v1719 = vrcp.pop %v1709
    %v1720 = vrcp.pop %v1712
    %v1721 = vmul.f32 %v1691, %v1713
    %v1722 = vmul.f32 %v1694, %v1714
    %v1723 = vmul.f32 %v1697, %v1715
    %v1724 = vmul.f32 %v1700, %v1716
    %v1725 = vmul.f32 %v1703, %v1717
    %v1726 = vmul.f32 %v1706, %v1718
    %v1727 = vmul.f32 %v1709, %v1719
    %v1728 = vmul.f32 %v1712, %v1720
    %v1729 = vsub.f32 2.0, %v1721
    %v1730 = vsub.f32 2.0, %v1722
    %v1731 = vsub.f32 2.0, %v1723
    %v1732 = vsub.f32 2.0, %v1724
    %v1733 = vsub.f32 2.0, %v1725
    %v1734 = vsub.f32 2.0, %v1726
    %v1735 = vsub.f32 2.0, %v1727
    %v1736 = vsub.f32 2.0, %v1728
    %v1737 = vmul.f32 %v1713, %v1729
    %v1738 = vmul.f32 %v1714, %v1730
    %v1739 = vmul.f32 %v1715, %v1731
    %v1740 = vmul.f32 %v1716, %v1732
    %v1741 = vmul.f32 %v1717, %v1733
    %v1742 = vmul.f32 %v1718, %v1734
    %v1743 = vmul.f32 %v1719, %v1735
    %v1744 = vmul.f32 %v1720, %v1736
    %v1745 = vmul.f32 %v1674, %v1737
    %v1746 = vmul.f32 %v1676, %v1738
    %v1747 = vmul.f32 %v1678, %v1739
    %v1748 = vmul.f32 %v1680, %v1740
    %v1749 = vmul.f32 %v1682, %v1741
    %v1750 = vmul.f32 %v1684, %v1742
    %v1751 = vmul.f32 %v1686, %v1743
    %v1752 = vmul.f32 %v1688, %v1744
    %v1757 = vrot.slane %v1745, 4
    %v1758 = vrot.slane %v1746, 4
    %v1759 = vrot.slane %v1747, 4
    %v1760 = vrot.slane %v1748, 4
    %v1765 = vrot.slane %v1746, 4
    %vm1766 = vcmask 1047556
    %v1767 = vsel %vm1766, %v1765, %v1745
    %v1769 = vunpack.c.l.s4 1983009808
    %v1770 = vunpack.c.0.s8 %v1769
    %v1771 = vperm.slane %v1767, %v1770
    %v1772 = vrot.slane %v1758, 4
    %v1773 = vsel %vm1766, %v1772, %v1757
    %v1775 = vunpack.c.l.s4 1983009808
    %v1776 = vunpack.c.0.s8 %v1775
    %v1777 = vperm.slane %v1773, %v1776
    %v1778 = vrot.slane %v1777, 4
    %v1779 = vsel %vm1766, %v1778, %v1771
    %v1780 = vrot.slane %v1771, 4
    %v1781 = vsel %vm1766, %v1777, %v1780
    %v1783 = vunpack.c.l.s4 1934713408
    %v1784 = vunpack.c.0.s8 %v1783
    %v1785 = vperm.slane %v1779, %v1784
    %v1787 = vunpack.c.l.s4 1934713408
    %v1788 = vunpack.c.0.s8 %v1787
    %v1789 = vperm.slane %v1781, %v1788
    %v1790 = vrot.slane %v1785, 4
    %v1791 = vsel %vm1766, 0.0, %v1790
    %v1792 = vrot.slane %v1789, 4
    %v1793 = vsel %vm1766, 0.0, %v1792
    %v1794 = vrot.slane %v1748, 4
    %v1795 = vsel %vm1766, %v1794, %v1747
    %v1797 = vunpack.c.l.s4 1983009808
    %v1798 = vunpack.c.0.s8 %v1797
    %v1799 = vperm.slane %v1795, %v1798
    %v1800 = vrot.slane %v1760, 4
    %v1801 = vsel %vm1766, %v1800, %v1759
    %v1803 = vunpack.c.l.s4 1983009808
    %v1804 = vunpack.c.0.s8 %v1803
    %v1805 = vperm.slane %v1801, %v1804
    %v1806 = vrot.slane %v1805, 4
    %v1807 = vsel %vm1766, %v1806, %v1799
    %v1808 = vrot.slane %v1799, 4
    %v1809 = vsel %vm1766, %v1805, %v1808
    %v1811 = vunpack.c.l.s4 1934713408
    %v1812 = vunpack.c.0.s8 %v1811
    %v1813 = vperm.slane %v1807, %v1812
    %v1815 = vunpack.c.l.s4 1934713408
    %v1816 = vunpack.c.0.s8 %v1815
    %v1817 = vperm.slane %v1809, %v1816
    %v1818 = vrot.slane %v1813, 4
    %v1819 = vsel %vm1766, 0.0, %v1818
    %v1820 = vrot.slane %v1817, 4
    %v1821 = vsel %vm1766, 0.0, %v1820
    %v1826 = vrot.slane %v1749, 4
    %v1827 = vrot.slane %v1750, 4
    %v1828 = vrot.slane %v1751, 4
    %v1829 = vrot.slane %v1752, 4
    %v1834 = vrot.slane %v1750, 4
    %v1835 = vsel %vm1766, %v1834, %v1749
    %v1837 = vunpack.c.l.s4 1983009808
    %v1838 = vunpack.c.0.s8 %v1837
    %v1839 = vperm.slane %v1835, %v1838
    %v1840 = vrot.slane %v1827, 4
    %v1841 = vsel %vm1766, %v1840, %v1826
    %v1843 = vunpack.c.l.s4 1983009808
    %v1844 = vunpack.c.0.s8 %v1843
    %v1845 = vperm.slane %v1841, %v1844
    %v1846 = vrot.slane %v1845, 4
    %v1847 = vsel %vm1766, %v1846, %v1839
    %v1848 = vrot.slane %v1839, 4
    %v1849 = vsel %vm1766, %v1845, %v1848
    %v1851 = vunpack.c.l.s4 1934713408
    %v1852 = vunpack.c.0.s8 %v1851
    %v1853 = vperm.slane %v1847, %v1852
    %v1855 = vunpack.c.l.s4 1934713408
    %v1856 = vunpack.c.0.s8 %v1855
    %v1857 = vperm.slane %v1849, %v1856
    %v1858 = vrot.slane %v1853, 4
    %v1859 = vsel %vm1766, 0.0, %v1858
    %v1860 = vrot.slane %v1857, 4
    %v1861 = vsel %vm1766, 0.0, %v1860
    %v1862 = vrot.slane %v1752, 4
    %v1863 = vsel %vm1766, %v1862, %v1751
    %v1865 = vunpack.c.l.s4 1983009808
    %v1866 = vunpack.c.0.s8 %v1865
    %v1867 = vperm.slane %v1863, %v1866
    %v1868 = vrot.slane %v1829, 4
    %v1869 = vsel %vm1766, %v1868, %v1828
    %v1871 = vunpack.c.l.s4 1983009808
    %v1872 = vunpack.c.0.s8 %v1871
    %v1873 = vperm.slane %v1869, %v1872
    %v1874 = vrot.slane %v1873, 4
    %v1875 = vsel %vm1766, %v1874, %v1867
    %v1876 = vrot.slane %v1867, 4
    %v1877 = vsel %vm1766, %v1873, %v1876
    %v1879 = vunpack.c.l.s4 1934713408
    %v1880 = vunpack.c.0.s8 %v1879
    %v1881 = vperm.slane %v1875, %v1880
    %v1883 = vunpack.c.l.s4 1934713408
    %v1884 = vunpack.c.0.s8 %v1883
    %v1885 = vperm.slane %v1877, %v1884
    %v1886 = vrot.slane %v1881, 4
    %v1887 = vsel %vm1766, 0.0, %v1886
    %v1888 = vrot.slane %v1885, 4
    %v1889 = vsel %vm1766, 0.0, %v1888
    %1898 = vst [vmem:[#allocation1] ss:$2 sm:$0xff] %v1785
    %s1899 = scalar_lea.vmem [#allocation1], 1
    %1900 = vst [vmem:[%s1899] ss:$2 sm:$0xff] %v1813
    %s1901 = scalar_lea.vmem [#allocation1], 16
    %1902 = vst [vmem:[%s1901] ss:$2 sm:$0xff] %v1791
    %s1903 = scalar_lea.vmem [#allocation1], 17
    %1904 = vst [vmem:[%s1903] ss:$2 sm:$0xff] %v1819
    %s1905 = scalar_lea.vmem [#allocation1], 32
    %1906 = vst [vmem:[%s1905] ss:$2 sm:$0xff] %v1789
    %s1907 = scalar_lea.vmem [#allocation1], 33
    %1908 = vst [vmem:[%s1907] ss:$2 sm:$0xff] %v1817
    %s1909 = scalar_lea.vmem [#allocation1], 48
    %1910 = vst [vmem:[%s1909] ss:$2 sm:$0xff] %v1793
    %s1911 = scalar_lea.vmem [#allocation1], 49
    %1912 = vst [vmem:[%s1911] ss:$2 sm:$0xff] %v1821
    %v1913 = vld.sshfl [vmem:[#allocation1] sm:$0xff pattern:$0x75316420]
    %v1914 = vld.sshfl [vmem:[#allocation1 + $0x10] sm:$0xff pattern:$0x75316420]
    %v1915 = vld.sshfl [vmem:[#allocation1 + $0x20] sm:$0xff pattern:$0x75316420]
    %v1916 = vld.sshfl [vmem:[#allocation1 + $0x30] sm:$0xff pattern:$0x75316420]
    %1925 = vst [vmem:[#allocation1] ss:$2 sm:$0xff] %v1853
    %s1926 = scalar_lea.vmem [#allocation1], 1
    %1927 = vst [vmem:[%s1926] ss:$2 sm:$0xff] %v1881
    %s1928 = scalar_lea.vmem [#allocation1], 16
    %1929 = vst [vmem:[%s1928] ss:$2 sm:$0xff] %v1859
    %s1930 = scalar_lea.vmem [#allocation1], 17
    %1931 = vst [vmem:[%s1930] ss:$2 sm:$0xff] %v1887
    %s1932 = scalar_lea.vmem [#allocation1], 32
    %1933 = vst [vmem:[%s1932] ss:$2 sm:$0xff] %v1857
    %s1934 = scalar_lea.vmem [#allocation1], 33
    %1935 = vst [vmem:[%s1934] ss:$2 sm:$0xff] %v1885
    %s1936 = scalar_lea.vmem [#allocation1], 48
    %1937 = vst [vmem:[%s1936] ss:$2 sm:$0xff] %v1861
    %s1938 = scalar_lea.vmem [#allocation1], 49
    %1939 = vst [vmem:[%s1938] ss:$2 sm:$0xff] %v1889
    %v1940 = vld.sshfl [vmem:[#allocation1] sm:$0xff pattern:$0x75316420]
    %v1941 = vld.sshfl [vmem:[#allocation1 + $0x10] sm:$0xff pattern:$0x75316420]
    %v1942 = vld.sshfl [vmem:[#allocation1 + $0x20] sm:$0xff pattern:$0x75316420]
    %v1943 = vld.sshfl [vmem:[#allocation1 + $0x30] sm:$0xff pattern:$0x75316420]
    %v1944 = vsel %vm1004, %v1913, 0
    %v1946 = vsel %vm1004, %v1914, 0
    %v1948 = vsel %vm1004, %v1915, 0
    %v1950 = vsel %vm1004, %v1916, 0
    %v1952 = vsel %vm1004, %v1940, 0
    %v1954 = vsel %vm1004, %v1941, 0
    %v1956 = vsel %vm1004, %v1942, 0
    %v1958 = vsel %vm1004, %v1943, 0
    %1960 = vmatpush.msra.mxu0 0.0
    %1961 = vmatpush.msra.mxu0 0.0
    %1962 = vmatpush.msra.mxu0 0.0
    %1963 = vmatpush.msra.mxu0 0.0
    %1964 = vmatpush.msra.mxu0 0.0
    %1965 = vmatpush.msra.mxu0 0.0
    %1966 = vmatpush.msra.mxu0 0.0
    %1967 = vmatpush.msra.mxu0 0.0
    %1968 = vmatpush.msra.mxu0 %v584
    %1969 = vmatpush.msra.mxu0 %v582
    %1970 = vmatpush.msra.mxu0 %v580
    %1971 = vmatpush.msra.mxu0 %v578
    %1972 = vmatpush.msra.mxu0 %v576
    %1973 = vmatpush.msra.mxu0 %v574
    %1974 = vmatpush.msra.mxu0 %v572
    %1975 = vmatpush.msra.mxu0 %v570
    %1976 = vmatmul.f32.gmra.mxu0 %v1944
    %v1977 = vpop.f32.mrf.mxu0
    %v1978 = vadd.f32 0.0, %v1977
    %1979 = vmatmul.f32.gmra.mxu0 %v1946
    %v1980 = vpop.f32.mrf.mxu0
    %v1981 = vadd.f32 0.0, %v1980
    %1982 = vmatmul.f32.gmra.mxu0 %v1948
    %v1983 = vpop.f32.mrf.mxu0
    %v1984 = vadd.f32 0.0, %v1983
    %1985 = vmatmul.f32.gmra.mxu0 %v1950
    %v1986 = vpop.f32.mrf.mxu0
    %v1987 = vadd.f32 0.0, %v1986
    %1988 = vmatmul.f32.gmra.mxu0 %v1952
    %v1989 = vpop.f32.mrf.mxu0
    %v1990 = vadd.f32 0.0, %v1989
    %1991 = vmatmul.f32.gmra.mxu0 %v1954
    %v1992 = vpop.f32.mrf.mxu0
    %v1993 = vadd.f32 0.0, %v1992
    %1994 = vmatmul.f32.gmra.mxu0 %v1956
    %v1995 = vpop.f32.mrf.mxu0
    %v1996 = vadd.f32 0.0, %v1995
    %1997 = vmatmul.f32.gmra.mxu0 %v1958
    %v1998 = vpop.f32.mrf.mxu0
    %v1999 = vadd.f32 0.0, %v1998
    %2000 = vdwg.mxu0
    %2001 = vmatpush.msra.mxu0 0.0
    %2002 = vmatpush.msra.mxu0 0.0
    %2003 = vmatpush.msra.mxu0 0.0
    %2004 = vmatpush.msra.mxu0 0.0
    %2005 = vmatpush.msra.mxu0 0.0
    %2006 = vmatpush.msra.mxu0 0.0
    %2007 = vmatpush.msra.mxu0 0.0
    %2008 = vmatpush.msra.mxu0 0.0
    %2009 = vmatpush.msra.mxu0 %v585
    %2010 = vmatpush.msra.mxu0 %v583
    %2011 = vmatpush.msra.mxu0 %v581
    %2012 = vmatpush.msra.mxu0 %v579
    %2013 = vmatpush.msra.mxu0 %v577
    %2014 = vmatpush.msra.mxu0 %v575
    %2015 = vmatpush.msra.mxu0 %v573
    %2016 = vmatpush.msra.mxu0 %v571
    %2017 = vmatmul.f32.gmra.mxu0 %v1944
    %v2018 = vpop.f32.mrf.mxu0
    %v2019 = vadd.f32 0.0, %v2018
    %2020 = vmatmul.f32.gmra.mxu0 %v1946
    %v2021 = vpop.f32.mrf.mxu0
    %v2022 = vadd.f32 0.0, %v2021
    %2023 = vmatmul.f32.gmra.mxu0 %v1948
    %v2024 = vpop.f32.mrf.mxu0
    %v2025 = vadd.f32 0.0, %v2024
    %2026 = vmatmul.f32.gmra.mxu0 %v1950
    %v2027 = vpop.f32.mrf.mxu0
    %v2028 = vadd.f32 0.0, %v2027
    %2029 = vmatmul.f32.gmra.mxu0 %v1952
    %v2030 = vpop.f32.mrf.mxu0
    %v2031 = vadd.f32 0.0, %v2030
    %2032 = vmatmul.f32.gmra.mxu0 %v1954
    %v2033 = vpop.f32.mrf.mxu0
    %v2034 = vadd.f32 0.0, %v2033
    %2035 = vmatmul.f32.gmra.mxu0 %v1956
    %v2036 = vpop.f32.mrf.mxu0
    %v2037 = vadd.f32 0.0, %v2036
    %2038 = vmatmul.f32.gmra.mxu0 %v1958
    %v2039 = vpop.f32.mrf.mxu0
    %v2040 = vadd.f32 0.0, %v2039
    %2041 = vdwg.mxu0
    %2042 = vset.pattern.permute.xlu0 10
    %2043 = vperm.xlu0 %2042, %v50
    %v2044 = vpop.permute.xlu0 %2043
    %2046 = vset.pattern.permute.xlu0 10
    %2047 = vperm.xlu0 %2046, %v51
    %v2048 = vpop.permute.xlu0 %2047
    %2050 = vset.pattern.permute.xlu0 10
    %2051 = vperm.xlu0 %2050, %v52
    %v2052 = vpop.permute.xlu0 %2051
    %2054 = vset.pattern.permute.xlu0 10
    %2055 = vperm.xlu0 %2054, %v53
    %v2056 = vpop.permute.xlu0 %2055
    %2058 = vset.pattern.permute.xlu0 10
    %2059 = vperm.xlu0 %2058, %v54
    %v2060 = vpop.permute.xlu0 %2059
    %2062 = vset.pattern.permute.xlu0 10
    %2063 = vperm.xlu0 %2062, %v55
    %v2064 = vpop.permute.xlu0 %2063
    %2066 = vset.pattern.permute.xlu0 10
    %2067 = vperm.xlu0 %2066, %v56
    %v2068 = vpop.permute.xlu0 %2067
    %2070 = vset.pattern.permute.xlu0 10
    %2071 = vperm.xlu0 %2070, %v57
    %v2072 = vpop.permute.xlu0 %2071
    %v2074 = vmul.f32 %v2044, %v1978
    %v2075 = vmul.f32 %v2044, %v2019
    %v2076 = vmul.f32 %v2048, %v1981
    %v2077 = vmul.f32 %v2048, %v2022
    %v2078 = vmul.f32 %v2052, %v1984
    %v2079 = vmul.f32 %v2052, %v2025
    %v2080 = vmul.f32 %v2056, %v1987
    %v2081 = vmul.f32 %v2056, %v2028
    %v2082 = vmul.f32 %v2060, %v1990
    %v2083 = vmul.f32 %v2060, %v2031
    %v2084 = vmul.f32 %v2064, %v1993
    %v2085 = vmul.f32 %v2064, %v2034
    %v2086 = vmul.f32 %v2068, %v1996
    %v2087 = vmul.f32 %v2068, %v2037
    %v2088 = vmul.f32 %v2072, %v1999
    %v2089 = vmul.f32 %v2072, %v2040
    %2090 = vset.pattern.permute.xlu0 11
    %2091 = vperm.xlu0 %2090, %v50
    %v2092 = vpop.permute.xlu0 %2091
    %2094 = vset.pattern.permute.xlu0 11
    %2095 = vperm.xlu0 %2094, %v51
    %v2096 = vpop.permute.xlu0 %2095
    %2098 = vset.pattern.permute.xlu0 11
    %2099 = vperm.xlu0 %2098, %v52
    %v2100 = vpop.permute.xlu0 %2099
    %2102 = vset.pattern.permute.xlu0 11
    %2103 = vperm.xlu0 %2102, %v53
    %v2104 = vpop.permute.xlu0 %2103
    %2106 = vset.pattern.permute.xlu0 11
    %2107 = vperm.xlu0 %2106, %v54
    %v2108 = vpop.permute.xlu0 %2107
    %2110 = vset.pattern.permute.xlu0 11
    %2111 = vperm.xlu0 %2110, %v55
    %v2112 = vpop.permute.xlu0 %2111
    %2114 = vset.pattern.permute.xlu0 11
    %2115 = vperm.xlu0 %2114, %v56
    %v2116 = vpop.permute.xlu0 %2115
    %2118 = vset.pattern.permute.xlu0 11
    %2119 = vperm.xlu0 %2118, %v57
    %v2120 = vpop.permute.xlu0 %2119
    %v2122 = vadd.f32 %v2074, %v2092
    %v2123 = vadd.f32 %v2075, %v2092
    %v2124 = vadd.f32 %v2076, %v2096
    %v2125 = vadd.f32 %v2077, %v2096
    %v2126 = vadd.f32 %v2078, %v2100
    %v2127 = vadd.f32 %v2079, %v2100
    %v2128 = vadd.f32 %v2080, %v2104
    %v2129 = vadd.f32 %v2081, %v2104
    %v2130 = vadd.f32 %v2082, %v2108
    %v2131 = vadd.f32 %v2083, %v2108
    %v2132 = vadd.f32 %v2084, %v2112
    %v2133 = vadd.f32 %v2085, %v2112
    %v2134 = vadd.f32 %v2086, %v2116
    %v2135 = vadd.f32 %v2087, %v2116
    %v2136 = vadd.f32 %v2088, %v2120
    %v2137 = vadd.f32 %v2089, %v2120
    %2138 = vst [vmem:[#allocation7] sm:$0xff] %v2122
    %2139 = vst [vmem:[#allocation7 + $0x8] sm:$0xff] %v2123
    %2140 = vst [vmem:[#allocation7 + $0x10] sm:$0xff] %v2124
    %2141 = vst [vmem:[#allocation7 + $0x18] sm:$0xff] %v2125
    %2142 = vst [vmem:[#allocation7 + $0x20] sm:$0xff] %v2126
    %2143 = vst [vmem:[#allocation7 + $0x28] sm:$0xff] %v2127
    %2144 = vst [vmem:[#allocation7 + $0x30] sm:$0xff] %v2128
    %2145 = vst [vmem:[#allocation7 + $0x38] sm:$0xff] %v2129
    %2146 = vst [vmem:[#allocation7 + $0x40] sm:$0xff] %v2130
    %2147 = vst [vmem:[#allocation7 + $0x48] sm:$0xff] %v2131
    %2148 = vst [vmem:[#allocation7 + $0x50] sm:$0xff] %v2132
    %2149 = vst [vmem:[#allocation7 + $0x58] sm:$0xff] %v2133
    %2150 = vst [vmem:[#allocation7 + $0x60] sm:$0xff] %v2134
    %2151 = vst [vmem:[#allocation7 + $0x68] sm:$0xff] %v2135
    %2152 = vst [vmem:[#allocation7 + $0x70] sm:$0xff] %v2136
    %2153 = vst [vmem:[#allocation7 + $0x78] sm:$0xff] %v2137
    // Predicated region
    $region26: #{tpu_custom_call.1} parent=1 // pred_check
      _
    $region27: #{tpu_custom_call.1} parent=1 // pred_check_branch
      %2155 = sbr.rel (0) target = $region29
    $region28: #{tpu_custom_call.1} parent=1 // pred_region
      %2157 = vsyncadd [#allocation4], 0
      %s2158 = sshll.u32 [#allocation7], 4
      %s2159 = int_to_ptr.vmem [resolvable:$true] %s2158
      %s2160 = sshll.u32 %s4, 4
      %s2161 = int_to_ptr.hbm [resolvable:$true] %s2160
      %2166 = dma.vmem_to_hbm [thread:$0]  %s2159, 2048, %s2161, [#allocation4], 256, 256, 16
    $region29: #{tpu_custom_call.1} parent=1 // pred_fallthru
      _
    // Predicated region
    $region30: #{tpu_custom_call.1} parent=1 // pred_check
      _
    $region31: #{tpu_custom_call.1} parent=1 // pred_check_branch
      %2168 = sbr.rel (0) target = $region33
    $region32: #{tpu_custom_call.1} parent=1 // pred_region
      %2170 = dma.done [#allocation4], 2048
    $region33: #{tpu_custom_call.1} parent=1 // pred_fallthru
      _
    %2171 = vsyncpa [#allocation3], 1
    %2172 = vsyncpa [#allocation6], 1
    %2173 = vsyncpa [#allocation4], 1

</llo_original>
